<compile_context>
chip_gen: v7x
topology: tpu7x:2x2x1
jax: 0.10.0
libtpu: 0.0.40
codegen_flags: <defaults>
</compile_context>

<pallas_src>
import jax
import jax.numpy as jnp
from jax import lax
from jax.experimental import pallas as pl
from jax.experimental.pallas import tpu as pltpu


def _mha_kernel(x_ref, wqkv_ref, wo_ref, bo_ref, o_ref):
    """Fused MHA for a (B, T, E) slab.

    x_ref    : (B, T, E)      f32  activations (B = per-block batch)
    wqkv_ref : (3*NH, E, HS)  bf16 head-major packed [Q*scale | K | V] weights
    wo_ref   : (NH, HS, E)    bf16 output projection weight (head-major)
    bo_ref   : (1, E)         f32  output projection bias
    o_ref    : (B, T, E)      f32
    """
    B, T, E = x_ref.shape
    three_nh, _, HS = wqkv_ref.shape
    NH = three_nh // 3

    # Flatten batch into the row (sublane) axis once; cast once to bf16.
    xb = x_ref[...].reshape(B * T, E).astype(jnp.bfloat16)            # (BT, E)
    xh = jnp.broadcast_to(xb, (three_nh, B * T, E))                   # (3NH, BT, E)

    # Q/K/V for every head in one batched MXU call; scale already folded into
    # the Q sections of wqkv at pack time.
    qkv = lax.dot_general(
        xh, wqkv_ref[...],
        dimension_numbers=(((2,), (1,)), ((0,), (0,))),
        preferred_element_type=jnp.float32).astype(jnp.bfloat16)      # (3NH, BT, HS)

    # Leading-dim slices (free) + leading-dim reshapes to (head*batch, T, HS).
    q = qkv[0 * NH:1 * NH].reshape(NH * B, T, HS)
    k = qkv[1 * NH:2 * NH].reshape(NH * B, T, HS)
    v = qkv[2 * NH:3 * NH].reshape(NH * B, T, HS)

    # Scores: batched over head*batch, contracting HS (no explicit transpose).
    s = lax.dot_general(q, k,
                        dimension_numbers=(((2,), (2,)), ((0,), (0,))),
                        preferred_element_type=jnp.float32)           # (NH*B, T, T)

    # Softmax in f32 (no mask in the reference module); EUP reciprocal.
    s = s - jnp.max(s, axis=-1, keepdims=True)
    e = jnp.exp(s)
    p = e * pl.reciprocal(jnp.sum(e, axis=-1, keepdims=True), approx=True)

    # P @ V, batched over head*batch.
    pv = lax.dot_general(p.astype(jnp.bfloat16), v,
                         dimension_numbers=(((2,), (1,)), ((0,), (0,))),
                         preferred_element_type=jnp.float32)          # (NH*B, T, HS)

    # Output projection without concat: per-head (BT, HS) @ (HS, E), then sum
    # over heads (equivalent to concat + (BT, NH*HS) @ (NH*HS, E)).
    pvh = pv.reshape(NH, B * T, HS).astype(jnp.bfloat16)              # (NH, BT, HS)
    outh = lax.dot_general(pvh, wo_ref[...],
                           dimension_numbers=(((2,), (1,)), ((0,), (0,))),
                           preferred_element_type=jnp.float32)        # (NH, BT, E)
    out = jnp.sum(outh, axis=0) + bo_ref[...]                         # (BT, E)

    # TODO(synk): nn.Dropout(p=0.0) is the identity at eval time; no RNG dropout.
    o_ref[...] = out.reshape(B, T, E).astype(o_ref.dtype)


def pack_mha_params(wq, wk, wv, wo, bo):
    """One-time parameter packing (do NOT call per forward pass).

    wq/wk/wv: (NH, E, HS) f32, wo: (NH*HS, E) f32, bo: (E,) f32.
    Folds the 1/sqrt(HS) softmax scale into the Q weights, stacks head-major,
    reshapes wo head-major and casts the matmul operands to bf16.
    """
    NH, E, HS = wq.shape
    scale = float(HS) ** -0.5
    wqkv = jnp.concatenate([wq * scale, wk, wv], axis=0).astype(jnp.bfloat16)  # (3NH,E,HS)
    wo_h = wo.reshape(NH, HS, E).astype(jnp.bfloat16)                          # (NH,HS,E)
    bo_r = bo.reshape(1, E).astype(jnp.float32)                                # (1,E)
    return wqkv, wo_h, bo_r


def multi_head_attention(x, wqkv, wo_h, bo_r, *, batch_blocks=1):
    """x: (B, T, E) f32; packed params from pack_mha_params.

    batch_blocks=1 runs the whole batch in a single grid step (best on
    single-TC v5e/v6e); batch_blocks=2 keeps a 2-wide "parallel" axis so both
    v7x TensorCores get work.
    """
    B, T, E = x.shape
    three_nh, _, HS = wqkv.shape
    NH = three_nh // 3
    assert B % batch_blocks == 0
    bb = B // batch_blocks

    return pl.pallas_call(
        _mha_kernel,
        out_shape=jax.ShapeDtypeStruct((B, T, E), x.dtype),
        grid=(batch_blocks,),
        in_specs=[
            pl.BlockSpec((bb, T, E), lambda i: (i, 0, 0)),       # activation slab
            pl.BlockSpec((three_nh, E, HS), lambda i: (0, 0, 0)),  # weights resident
            pl.BlockSpec((NH, HS, E), lambda i: (0, 0, 0)),
            pl.BlockSpec((1, E), lambda i: (0, 0)),
        ],
        out_specs=pl.BlockSpec((bb, T, E), lambda i: (i, 0, 0)),
        compiler_params=pltpu.CompilerParams(
            dimension_semantics=("parallel",)),
    )(x, wqkv, wo_h, bo_r)


def mha_reference(x, wq, wk, wv, wo, bo):
    """Pure-JAX f32 reference mirroring the PyTorch forward."""
    outs = []
    for h in range(wq.shape[0]):
        q = x @ wq[h]
        k = x @ wk[h]
        v = x @ wv[h]
        wei = jnp.einsum("btd,bsd->bts", q, k) * (k.shape[-1] ** -0.5)
        wei = jax.nn.softmax(wei, axis=-1)
        outs.append(jnp.einsum("bts,bsd->btd", wei, v))
    cat = jnp.concatenate(outs, axis=-1)
    return cat @ wo + bo


if __name__ == "__main__":
    # Small, module-consistent shapes: batch=4, seq=8, n_embd=32,
    # num_heads=4, head_size=16 (head_size*num_heads != n_embd on purpose).
    B, T, E = 4, 8, 32
    NUM_HEADS, HEAD_SIZE = 4, 16

    key = jax.random.PRNGKey(0)
    kx, kq, kk, kv, kp, kb = jax.random.split(key, 6)

    x = jax.random.normal(kx, (B, T, E), jnp.float32)
    std = 0.05
    wq = std * jax.random.normal(kq, (NUM_HEADS, E, HEAD_SIZE), jnp.float32)
    wk = std * jax.random.normal(kk, (NUM_HEADS, E, HEAD_SIZE), jnp.float32)
    wv = std * jax.random.normal(kv, (NUM_HEADS, E, HEAD_SIZE), jnp.float32)
    wo = std * jax.random.normal(kp, (NUM_HEADS * HEAD_SIZE, E), jnp.float32)
    bo = std * jax.random.normal(kb, (E,), jnp.float32)

    # Pack once (init-time), not per call.
    packed = pack_mha_params(wq, wk, wv, wo, bo)

    out = multi_head_attention(x, *packed)
    out = jax.block_until_ready(out)

    assert out.shape == (B, T, E), out.shape
    assert bool(jnp.all(jnp.isfinite(out)))

    ref = mha_reference(x, wq, wk, wv, wo, bo)
    err = float(jnp.max(jnp.abs(out - ref)))
    # bf16 MXU operands + approx reciprocal in softmax -> loose tolerance.
    assert err < 5e-2, f"max abs err {err}"

    print("KERNEL_OK")
</pallas_src>

<mosaic_0001>
module attributes {stable_mosaic.version = 11 : i64} {
  func.func @_mha_kernel(%arg0: i32, %arg1: memref<4x8x32xf32, #tpu.memory_space<vmem>>, %arg2: memref<12x32x16xbf16, #tpu.memory_space<vmem>>, %arg3: memref<4x16x32xbf16, #tpu.memory_space<vmem>>, %arg4: memref<1x32xf32, #tpu.memory_space<vmem>>, %arg5: memref<4x8x32xf32, #tpu.memory_space<vmem>>) attributes {dimension_semantics = [#tpu.dimension_semantics<parallel>], iteration_bounds = array<i64: 1>, scalar_prefetch = 0 : i64, scratch_operands = 0 : i64, tpu.core_type = #tpu.core_type<tc>, window_params = [{transform_indices = @transform_0, window_bounds = array<i64: 4, 8, 32>}, {pipeline_mode = #tpu.pipeline_mode<synchronous>, transform_indices = @transform_1, window_bounds = array<i64: 12, 32, 16>}, {pipeline_mode = #tpu.pipeline_mode<synchronous>, transform_indices = @transform_2, window_bounds = array<i64: 4, 16, 32>}, {pipeline_mode = #tpu.pipeline_mode<synchronous>, transform_indices = @transform_3, window_bounds = array<i64: 1, 32>}, {transform_indices = @transform_4, window_bounds = array<i64: 4, 8, 32>}]} {
    %c0 = arith.constant 0 : index
    %c0_0 = arith.constant 0 : index
    %c0_1 = arith.constant 0 : index
    %0 = vector.load %arg1[%c0, %c0_0, %c0_1] : memref<4x8x32xf32, #tpu.memory_space<vmem>>, vector<4x8x32xf32>
    %1 = vector.shape_cast %0 : vector<4x8x32xf32> to vector<32x32xf32>
    %2 = arith.truncf %1 : vector<32x32xf32> to vector<32x32xbf16>
    %3 = vector.shape_cast %2 : vector<32x32xbf16> to vector<1x32x32xbf16>
    %4 = vector.broadcast %3 : vector<1x32x32xbf16> to vector<12x32x32xbf16>
    %c0_2 = arith.constant 0 : index
    %c0_3 = arith.constant 0 : index
    %c0_4 = arith.constant 0 : index
    %5 = vector.load %arg2[%c0_2, %c0_3, %c0_4] : memref<12x32x16xbf16, #tpu.memory_space<vmem>>, vector<12x32x16xbf16>
    %cst = arith.constant dense<0.000000e+00> : vector<12x32x16xf32>
    %6 = tpu.matmul %4, %5, %cst {dimension_numbers = #tpu.dot_dimension_numbers<[2], [1], [1], [2], [0, 0, 0, 1, 1, 2], [0], [0]>} : vector<12x32x32xbf16>, vector<12x32x16xbf16>, vector<12x32x16xf32> -> vector<12x32x16xf32>
    %7 = arith.truncf %6 : vector<12x32x16xf32> to vector<12x32x16xbf16>
    %8 = vector.extract_strided_slice %7 {offsets = [0, 0, 0], sizes = [4, 32, 16], strides = [1, 1, 1]} : vector<12x32x16xbf16> to vector<4x32x16xbf16>
    %9 = vector.shape_cast %8 : vector<4x32x16xbf16> to vector<16x8x16xbf16>
    %10 = vector.extract_strided_slice %7 {offsets = [4, 0, 0], sizes = [4, 32, 16], strides = [1, 1, 1]} : vector<12x32x16xbf16> to vector<4x32x16xbf16>
    %11 = vector.shape_cast %10 : vector<4x32x16xbf16> to vector<16x8x16xbf16>
    %12 = vector.extract_strided_slice %7 {offsets = [8, 0, 0], sizes = [4, 32, 16], strides = [1, 1, 1]} : vector<12x32x16xbf16> to vector<4x32x16xbf16>
    %13 = vector.shape_cast %12 : vector<4x32x16xbf16> to vector<16x8x16xbf16>
    %cst_5 = arith.constant dense<0.000000e+00> : vector<16x8x8xf32>
    %14 = tpu.matmul %9, %11, %cst_5 {dimension_numbers = #tpu.dot_dimension_numbers<[2], [2], [1], [1], [0, 0, 0, 1, 1, 1], [0], [0]>} : vector<16x8x16xbf16>, vector<16x8x16xbf16>, vector<16x8x8xf32> -> vector<16x8x8xf32>
    %cst_6 = arith.constant dense<0xFF800000> : vector<16x8xf32>
    %15 = vector.multi_reduction <maximumf>, %14, %cst_6 [2] : vector<16x8x8xf32> to vector<16x8xf32>
    %16 = vector.shape_cast %15 : vector<16x8xf32> to vector<16x8x1xf32>
    %17 = vector.broadcast %16 : vector<16x8x1xf32> to vector<16x8x8xf32>
    %18 = arith.subf %14, %17 : vector<16x8x8xf32>
    %19 = math.exp %18 : vector<16x8x8xf32>
    %cst_7 = arith.constant dense<0.000000e+00> : vector<16x8xf32>
    %20 = vector.multi_reduction <add>, %19, %cst_7 [2] : vector<16x8x8xf32> to vector<16x8xf32>
    %21 = vector.shape_cast %20 : vector<16x8xf32> to vector<16x8x1xf32>
    %22 = tpu.reciprocal %21 {approx = true} : vector<16x8x1xf32> -> vector<16x8x1xf32>
    %23 = vector.broadcast %22 : vector<16x8x1xf32> to vector<16x8x8xf32>
    %24 = arith.mulf %19, %23 : vector<16x8x8xf32>
    %25 = arith.truncf %24 : vector<16x8x8xf32> to vector<16x8x8xbf16>
    %cst_8 = arith.constant dense<0.000000e+00> : vector<16x8x16xf32>
    %26 = tpu.matmul %25, %13, %cst_8 {dimension_numbers = #tpu.dot_dimension_numbers<[2], [1], [1], [2], [0, 0, 0, 1, 1, 2], [0], [0]>} : vector<16x8x8xbf16>, vector<16x8x16xbf16>, vector<16x8x16xf32> -> vector<16x8x16xf32>
    %27 = vector.shape_cast %26 : vector<16x8x16xf32> to vector<4x32x16xf32>
    %28 = arith.truncf %27 : vector<4x32x16xf32> to vector<4x32x16xbf16>
    %c0_9 = arith.constant 0 : index
    %c0_10 = arith.constant 0 : index
    %c0_11 = arith.constant 0 : index
    %29 = vector.load %arg3[%c0_9, %c0_10, %c0_11] : memref<4x16x32xbf16, #tpu.memory_space<vmem>>, vector<4x16x32xbf16>
    %cst_12 = arith.constant dense<0.000000e+00> : vector<4x32x32xf32>
    %30 = tpu.matmul %28, %29, %cst_12 {dimension_numbers = #tpu.dot_dimension_numbers<[2], [1], [1], [2], [0, 0, 0, 1, 1, 2], [0], [0]>} : vector<4x32x16xbf16>, vector<4x16x32xbf16>, vector<4x32x32xf32> -> vector<4x32x32xf32>
    %cst_13 = arith.constant dense<0.000000e+00> : vector<32x32xf32>
    %31 = vector.multi_reduction <add>, %30, %cst_13 [0] : vector<4x32x32xf32> to vector<32x32xf32>
    %c0_14 = arith.constant 0 : index
    %c0_15 = arith.constant 0 : index
    %32 = vector.load %arg4[%c0_14, %c0_15] : memref<1x32xf32, #tpu.memory_space<vmem>>, vector<1x32xf32>
    %33 = vector.broadcast %32 : vector<1x32xf32> to vector<32x32xf32>
    %34 = arith.addf %31, %33 : vector<32x32xf32>
    %35 = vector.shape_cast %34 : vector<32x32xf32> to vector<4x8x32xf32>
    %c0_16 = arith.constant 0 : index
    %c0_17 = arith.constant 0 : index
    %c0_18 = arith.constant 0 : index
    %36 = vector.load %arg5[%c0_16, %c0_17, %c0_18] : memref<4x8x32xf32, #tpu.memory_space<vmem>>, vector<4x8x32xf32>
    tpu.vector_store %arg5[%c0_16, %c0_17, %c0_18], %35 {strides = array<i32>} : memref<4x8x32xf32, #tpu.memory_space<vmem>>, vector<4x8x32xf32>,
    return
  }
  func.func @transform_0(%arg0: i32) -> (i32, i32, i32) {
    %c0_i32 = arith.constant 0 : i32
    %c0_i32_0 = arith.constant 0 : i32
    %c0_i32_1 = arith.constant 0 : i32
    return %arg0, %c0_i32, %c0_i32_0 : i32, i32, i32
  }
  func.func @transform_1(%arg0: i32) -> (i32, i32, i32) {
    %c0_i32 = arith.constant 0 : i32
    %c0_i32_0 = arith.constant 0 : i32
    %c0_i32_1 = arith.constant 0 : i32
    %c0_i32_2 = arith.constant 0 : i32
    return %c0_i32, %c0_i32_0, %c0_i32_1 : i32, i32, i32
  }
  func.func @transform_2(%arg0: i32) -> (i32, i32, i32) {
    %c0_i32 = arith.constant 0 : i32
    %c0_i32_0 = arith.constant 0 : i32
    %c0_i32_1 = arith.constant 0 : i32
    %c0_i32_2 = arith.constant 0 : i32
    return %c0_i32, %c0_i32_0, %c0_i32_1 : i32, i32, i32
  }
  func.func @transform_3(%arg0: i32) -> (i32, i32) {
    %c0_i32 = arith.constant 0 : i32
    %c0_i32_0 = arith.constant 0 : i32
    %c0_i32_1 = arith.constant 0 : i32
    return %c0_i32, %c0_i32_0 : i32, i32
  }
  func.func @transform_4(%arg0: i32) -> (i32, i32, i32) {
    %c0_i32 = arith.constant 0 : i32
    %c0_i32_0 = arith.constant 0 : i32
    %c0_i32_1 = arith.constant 0 : i32
    return %arg0, %c0_i32, %c0_i32_0 : i32, i32, i32
  }
}

</mosaic_0001>

<llo_original>
// kernel: tpu_custom_call.1
$region0: #{tpu_custom_call.1}
  #allocation0 [shape = 'u32[]', space=smem, size = 0x4, offset = 0x4, fixed_abs, tag = 'smem constant byte address 0x4 - core index']
  #allocation1 [shape = 'u32[144,128]{1,0:T(1,128)}', space=vmem, size = 0x12000, scoped, tag = 'internal scratch']
  %s0 = inlined_call_operand.vmem [shape: f32[4,8,32], index: 0, kind: input, shape index: {}]
  %s1 = inlined_call_operand.vmem [shape: bf16[12,32,16], index: 1, kind: input, shape index: {}]
  %s2 = inlined_call_operand.vmem [shape: bf16[4,16,32], index: 2, kind: input, shape index: {}]
  %s3 = inlined_call_operand.vmem [shape: f32[1,32], index: 3, kind: input, shape index: {}]
  %s4 = inlined_call_operand.hbm [shape: f32[4,8,32], index: 4, kind: output, shape index: {}]
  %s5 = sld [smem:[#allocation0]]
  $region26: #{tpu_custom_call.1} parent=0
    _
  %s7 = ssub.s32 1, %s5
  %s8 = scalar_select 0, %s7, %s5
  $region1: #{tpu_custom_call.1} parent=0
    #allocation2 [shape = 'u8[16384]{0}', space=vmem, size = 0x4000, scoped, tag = 'output window, operand 0, single buffered']
    #allocation3 [shape = 's32[1]{0}', space=sflag, size = 0x4, scoped, tag = 'scoped memory for tpu_custom_call.1']
    %9 = vsyncpa [#allocation3], 0
    // Predicated region
    $region2: #{tpu_custom_call.1} parent=1 // pred_check
      _
    $region3: #{tpu_custom_call.1} parent=1 // pred_check_branch
      %11 = sbr.rel (0) target = $region5
    $region4: #{tpu_custom_call.1} parent=1 // pred_region
      _
    $region5: #{tpu_custom_call.1} parent=1 // pred_fallthru
      _
    // Predicated region
    $region6: #{tpu_custom_call.1} parent=1 // pred_check
      _
    $region7: #{tpu_custom_call.1} parent=1 // pred_check_branch
      %13 = sbr.rel (0) target = $region9
    $region8: #{tpu_custom_call.1} parent=1 // pred_region
      _
    $region9: #{tpu_custom_call.1} parent=1 // pred_fallthru
      _
    // Predicated region
    $region10: #{tpu_custom_call.1} parent=1 // pred_check
      _
    $region11: #{tpu_custom_call.1} parent=1 // pred_check_branch
      %15 = sbr.rel (0) target = $region13
    $region12: #{tpu_custom_call.1} parent=1 // pred_region
      _
    $region13: #{tpu_custom_call.1} parent=1 // pred_fallthru
      _
    // Predicated region
    $region14: #{tpu_custom_call.1} parent=1 // pred_check
      _
    $region15: #{tpu_custom_call.1} parent=1 // pred_check_branch
      %17 = sbr.rel (0) target = $region17
    $region16: #{tpu_custom_call.1} parent=1 // pred_region
      _
    $region17: #{tpu_custom_call.1} parent=1 // pred_fallthru
      _
    %v19 = vld [vmem:[%s0] sm:$0xff]
    %v20 = vld [vmem:[%s0 + $0x8] sm:$0xff]
    %v21 = vld [vmem:[%s0 + $0x10] sm:$0xff]
    %v22 = vld [vmem:[%s0 + $0x18] sm:$0xff]
    %v23 = vpack.c.bf16 %v20, %v19
    %v24 = vpack.c.bf16 %v22, %v21
    %v25 = vld [vmem:[%s1] sm:$0xf]
    %v26 = vld [vmem:[%s1 + $0x4] sm:$0xf]
    %v27 = vld [vmem:[%s1 + $0x8] sm:$0xf]
    %v28 = vld [vmem:[%s1 + $0xc] sm:$0xf]
    %v29 = vld [vmem:[%s1 + $0x10] sm:$0xf]
    %v30 = vld [vmem:[%s1 + $0x14] sm:$0xf]
    %v31 = vld [vmem:[%s1 + $0x18] sm:$0xf]
    %v32 = vld [vmem:[%s1 + $0x1c] sm:$0xf]
    %v33 = vld [vmem:[%s1 + $0x20] sm:$0xf]
    %v34 = vld [vmem:[%s1 + $0x24] sm:$0xf]
    %v35 = vld [vmem:[%s1 + $0x28] sm:$0xf]
    %v36 = vld [vmem:[%s1 + $0x2c] sm:$0xf]
    %v37 = vld [vmem:[%s1 + $0x30] sm:$0xf]
    %v38 = vld [vmem:[%s1 + $0x34] sm:$0xf]
    %v39 = vld [vmem:[%s1 + $0x38] sm:$0xf]
    %v40 = vld [vmem:[%s1 + $0x3c] sm:$0xf]
    %v41 = vld [vmem:[%s1 + $0x40] sm:$0xf]
    %v42 = vld [vmem:[%s1 + $0x44] sm:$0xf]
    %v43 = vld [vmem:[%s1 + $0x48] sm:$0xf]
    %v44 = vld [vmem:[%s1 + $0x4c] sm:$0xf]
    %v45 = vld [vmem:[%s1 + $0x50] sm:$0xf]
    %v46 = vld [vmem:[%s1 + $0x54] sm:$0xf]
    %v47 = vld [vmem:[%s1 + $0x58] sm:$0xf]
    %v48 = vld [vmem:[%s1 + $0x5c] sm:$0xf]
    %v49 = vld [vmem:[%s1 + $0x60] sm:$0xf]
    %v50 = vld [vmem:[%s1 + $0x64] sm:$0xf]
    %v51 = vld [vmem:[%s1 + $0x68] sm:$0xf]
    %v52 = vld [vmem:[%s1 + $0x6c] sm:$0xf]
    %v53 = vld [vmem:[%s1 + $0x70] sm:$0xf]
    %v54 = vld [vmem:[%s1 + $0x74] sm:$0xf]
    %v55 = vld [vmem:[%s1 + $0x78] sm:$0xf]
    %v56 = vld [vmem:[%s1 + $0x7c] sm:$0xf]
    %v57 = vld [vmem:[%s1 + $0x80] sm:$0xf]
    %v58 = vld [vmem:[%s1 + $0x84] sm:$0xf]
    %v59 = vld [vmem:[%s1 + $0x88] sm:$0xf]
    %v60 = vld [vmem:[%s1 + $0x8c] sm:$0xf]
    %v61 = vld [vmem:[%s1 + $0x90] sm:$0xf]
    %v62 = vld [vmem:[%s1 + $0x94] sm:$0xf]
    %v63 = vld [vmem:[%s1 + $0x98] sm:$0xf]
    %v64 = vld [vmem:[%s1 + $0x9c] sm:$0xf]
    %v65 = vld [vmem:[%s1 + $0xa0] sm:$0xf]
    %v66 = vld [vmem:[%s1 + $0xa4] sm:$0xf]
    %v67 = vld [vmem:[%s1 + $0xa8] sm:$0xf]
    %v68 = vld [vmem:[%s1 + $0xac] sm:$0xf]
    %v69 = vld [vmem:[%s1 + $0xb0] sm:$0xf]
    %v70 = vld [vmem:[%s1 + $0xb4] sm:$0xf]
    %v71 = vld [vmem:[%s1 + $0xb8] sm:$0xf]
    %v72 = vld [vmem:[%s1 + $0xbc] sm:$0xf]
    %v77 = vunpack.c.l.b16 %v25
    %v78 = vunpack.c.l.b16 %v26
    %v79 = vunpack.c.l.b16 %v27
    %v80 = vunpack.c.l.b16 %v28
    %v81 = vpack.c.b16 %v78, %v77
    %v82 = vpack.c.b16 %v80, %v79
    %vm85 = vcmask 261120
    %v87 = vsel %vm85, %v23, 0
    %v90 = vsel %vm85, %v24, 0
    %92 = vmatprep.subr.bf16.mxu0 0
    %93 = vmatpush1.bf16.msra.mxu0 %v81
    %94 = vmatprep.subr.bf16.mxu0 0
    %95 = vmatpush1.bf16.msra.mxu0 %v82
    %96 = vmatprep.subr.bf16.mxu0 0
    %97 = vmatpush1.bf16.msra.mxu0 0
    %98 = vmatprep.subr.bf16.mxu0 0
    %99 = vmatpush1.bf16.msra.mxu0 0
    %100 = vmatprep.subr.bf16.mxu0 0
    %101 = vmatpush1.bf16.msra.mxu0 0
    %102 = vmatprep.subr.bf16.mxu0 0
    %103 = vmatpush1.bf16.msra.mxu0 0
    %104 = vmatprep.subr.bf16.mxu0 0
    %105 = vmatpush1.bf16.msra.mxu0 0
    %106 = vmatprep.subr.bf16.mxu0 0
    %107 = vmatpush1.bf16.msra.mxu0 0
    %108 = vmatprep.subr.bf16.mxu0 0
    %109 = vmatpush1.bf16.msra.mxu0 0
    %110 = vmatprep.subr.bf16.mxu0 0
    %111 = vmatpush1.bf16.msra.mxu0 0
    %112 = vmatprep.subr.bf16.mxu0 0
    %113 = vmatpush1.bf16.msra.mxu0 0
    %114 = vmatprep.subr.bf16.mxu0 0
    %115 = vmatpush1.bf16.msra.mxu0 0
    %116 = vmatprep.subr.bf16.mxu0 0
    %117 = vmatpush1.bf16.msra.mxu0 0
    %118 = vmatprep.subr.bf16.mxu0 0
    %119 = vmatpush1.bf16.msra.mxu0 0
    %120 = vmatprep.subr.bf16.mxu0 0
    %121 = vmatpush1.bf16.msra.mxu0 0
    %122 = vmatprep.subr.bf16.mxu0 0
    %123 = vmatpush1.bf16.msra.mxu0 0
    %124 = vmatprep.mubr.bf16.mxu0 0
    %125 = vmatmul.mubr.bf16.gmra.mrb[0].mxu0 %v87
    %v126 = vpop.f32.mrb[0].mxu0
    %v127 = vadd.f32 0.0, %v126
    %v128 = vpop.f32.mrb[0].mxu0
    %v129 = vpop.f32.mrb[0].mxu0
    %v130 = vadd.f32 0.0, %v129
    %v131 = vpop.f32.mrb[0].mxu0
    %132 = vmatprep.mubr.bf16.mxu0 0
    %133 = vmatmul.mubr.bf16.gmra.mrb[0].mxu0 %v90
    %v134 = vpop.f32.mrb[0].mxu0
    %v135 = vadd.f32 0.0, %v134
    %v136 = vpop.f32.mrb[0].mxu0
    %v137 = vpop.f32.mrb[0].mxu0
    %v138 = vadd.f32 0.0, %v137
    %v139 = vpop.f32.mrb[0].mxu0
    %140 = vdwg.mxu0
    %v145 = vunpack.c.l.b16 %v29
    %v146 = vunpack.c.l.b16 %v30
    %v147 = vunpack.c.l.b16 %v31
    %v148 = vunpack.c.l.b16 %v32
    %v149 = vpack.c.b16 %v146, %v145
    %v150 = vpack.c.b16 %v148, %v147
    %153 = vmatprep.subr.bf16.mxu0 0
    %154 = vmatpush1.bf16.msra.mxu0 %v149
    %155 = vmatprep.subr.bf16.mxu0 0
    %156 = vmatpush1.bf16.msra.mxu0 %v150
    %157 = vmatprep.subr.bf16.mxu0 0
    %158 = vmatpush1.bf16.msra.mxu0 0
    %159 = vmatprep.subr.bf16.mxu0 0
    %160 = vmatpush1.bf16.msra.mxu0 0
    %161 = vmatprep.subr.bf16.mxu0 0
    %162 = vmatpush1.bf16.msra.mxu0 0
    %163 = vmatprep.subr.bf16.mxu0 0
    %164 = vmatpush1.bf16.msra.mxu0 0
    %165 = vmatprep.subr.bf16.mxu0 0
    %166 = vmatpush1.bf16.msra.mxu0 0
    %167 = vmatprep.subr.bf16.mxu0 0
    %168 = vmatpush1.bf16.msra.mxu0 0
    %169 = vmatprep.subr.bf16.mxu0 0
    %170 = vmatpush1.bf16.msra.mxu0 0
    %171 = vmatprep.subr.bf16.mxu0 0
    %172 = vmatpush1.bf16.msra.mxu0 0
    %173 = vmatprep.subr.bf16.mxu0 0
    %174 = vmatpush1.bf16.msra.mxu0 0
    %175 = vmatprep.subr.bf16.mxu0 0
    %176 = vmatpush1.bf16.msra.mxu0 0
    %177 = vmatprep.subr.bf16.mxu0 0
    %178 = vmatpush1.bf16.msra.mxu0 0
    %179 = vmatprep.subr.bf16.mxu0 0
    %180 = vmatpush1.bf16.msra.mxu0 0
    %181 = vmatprep.subr.bf16.mxu0 0
    %182 = vmatpush1.bf16.msra.mxu0 0
    %183 = vmatprep.subr.bf16.mxu0 0
    %184 = vmatpush1.bf16.msra.mxu0 0
    %185 = vmatprep.mubr.bf16.mxu0 0
    %186 = vmatmul.mubr.bf16.gmra.mrb[0].mxu0 %v87
    %v187 = vpop.f32.mrb[0].mxu0
    %v188 = vadd.f32 0.0, %v187
    %v189 = vpop.f32.mrb[0].mxu0
    %v190 = vpop.f32.mrb[0].mxu0
    %v191 = vadd.f32 0.0, %v190
    %v192 = vpop.f32.mrb[0].mxu0
    %193 = vmatprep.mubr.bf16.mxu0 0
    %194 = vmatmul.mubr.bf16.gmra.mrb[0].mxu0 %v90
    %v195 = vpop.f32.mrb[0].mxu0
    %v196 = vadd.f32 0.0, %v195
    %v197 = vpop.f32.mrb[0].mxu0
    %v198 = vpop.f32.mrb[0].mxu0
    %v199 = vadd.f32 0.0, %v198
    %v200 = vpop.f32.mrb[0].mxu0
    %201 = vdwg.mxu0
    %v206 = vunpack.c.l.b16 %v33
    %v207 = vunpack.c.l.b16 %v34
    %v208 = vunpack.c.l.b16 %v35
    %v209 = vunpack.c.l.b16 %v36
    %v210 = vpack.c.b16 %v207, %v206
    %v211 = vpack.c.b16 %v209, %v208
    %214 = vmatprep.subr.bf16.mxu0 0
    %215 = vmatpush1.bf16.msra.mxu0 %v210
    %216 = vmatprep.subr.bf16.mxu0 0
    %217 = vmatpush1.bf16.msra.mxu0 %v211
    %218 = vmatprep.subr.bf16.mxu0 0
    %219 = vmatpush1.bf16.msra.mxu0 0
    %220 = vmatprep.subr.bf16.mxu0 0
    %221 = vmatpush1.bf16.msra.mxu0 0
    %222 = vmatprep.subr.bf16.mxu0 0
    %223 = vmatpush1.bf16.msra.mxu0 0
    %224 = vmatprep.subr.bf16.mxu0 0
    %225 = vmatpush1.bf16.msra.mxu0 0
    %226 = vmatprep.subr.bf16.mxu0 0
    %227 = vmatpush1.bf16.msra.mxu0 0
    %228 = vmatprep.subr.bf16.mxu0 0
    %229 = vmatpush1.bf16.msra.mxu0 0
    %230 = vmatprep.subr.bf16.mxu0 0
    %231 = vmatpush1.bf16.msra.mxu0 0
    %232 = vmatprep.subr.bf16.mxu0 0
    %233 = vmatpush1.bf16.msra.mxu0 0
    %234 = vmatprep.subr.bf16.mxu0 0
    %235 = vmatpush1.bf16.msra.mxu0 0
    %236 = vmatprep.subr.bf16.mxu0 0
    %237 = vmatpush1.bf16.msra.mxu0 0
    %238 = vmatprep.subr.bf16.mxu0 0
    %239 = vmatpush1.bf16.msra.mxu0 0
    %240 = vmatprep.subr.bf16.mxu0 0
    %241 = vmatpush1.bf16.msra.mxu0 0
    %242 = vmatprep.subr.bf16.mxu0 0
    %243 = vmatpush1.bf16.msra.mxu0 0
    %244 = vmatprep.subr.bf16.mxu0 0
    %245 = vmatpush1.bf16.msra.mxu0 0
    %246 = vmatprep.mubr.bf16.mxu0 0
    %247 = vmatmul.mubr.bf16.gmra.mrb[0].mxu0 %v87
    %v248 = vpop.f32.mrb[0].mxu0
    %v249 = vadd.f32 0.0, %v248
    %v250 = vpop.f32.mrb[0].mxu0
    %v251 = vpop.f32.mrb[0].mxu0
    %v252 = vadd.f32 0.0, %v251
    %v253 = vpop.f32.mrb[0].mxu0
    %254 = vmatprep.mubr.bf16.mxu0 0
    %255 = vmatmul.mubr.bf16.gmra.mrb[0].mxu0 %v90
    %v256 = vpop.f32.mrb[0].mxu0
    %v257 = vadd.f32 0.0, %v256
    %v258 = vpop.f32.mrb[0].mxu0
    %v259 = vpop.f32.mrb[0].mxu0
    %v260 = vadd.f32 0.0, %v259
    %v261 = vpop.f32.mrb[0].mxu0
    %262 = vdwg.mxu0
    %v267 = vunpack.c.l.b16 %v37
    %v268 = vunpack.c.l.b16 %v38
    %v269 = vunpack.c.l.b16 %v39
    %v270 = vunpack.c.l.b16 %v40
    %v271 = vpack.c.b16 %v268, %v267
    %v272 = vpack.c.b16 %v270, %v269
    %275 = vmatprep.subr.bf16.mxu0 0
    %276 = vmatpush1.bf16.msra.mxu0 %v271
    %277 = vmatprep.subr.bf16.mxu0 0
    %278 = vmatpush1.bf16.msra.mxu0 %v272
    %279 = vmatprep.subr.bf16.mxu0 0
    %280 = vmatpush1.bf16.msra.mxu0 0
    %281 = vmatprep.subr.bf16.mxu0 0
    %282 = vmatpush1.bf16.msra.mxu0 0
    %283 = vmatprep.subr.bf16.mxu0 0
    %284 = vmatpush1.bf16.msra.mxu0 0
    %285 = vmatprep.subr.bf16.mxu0 0
    %286 = vmatpush1.bf16.msra.mxu0 0
    %287 = vmatprep.subr.bf16.mxu0 0
    %288 = vmatpush1.bf16.msra.mxu0 0
    %289 = vmatprep.subr.bf16.mxu0 0
    %290 = vmatpush1.bf16.msra.mxu0 0
    %291 = vmatprep.subr.bf16.mxu0 0
    %292 = vmatpush1.bf16.msra.mxu0 0
    %293 = vmatprep.subr.bf16.mxu0 0
    %294 = vmatpush1.bf16.msra.mxu0 0
    %295 = vmatprep.subr.bf16.mxu0 0
    %296 = vmatpush1.bf16.msra.mxu0 0
    %297 = vmatprep.subr.bf16.mxu0 0
    %298 = vmatpush1.bf16.msra.mxu0 0
    %299 = vmatprep.subr.bf16.mxu0 0
    %300 = vmatpush1.bf16.msra.mxu0 0
    %301 = vmatprep.subr.bf16.mxu0 0
    %302 = vmatpush1.bf16.msra.mxu0 0
    %303 = vmatprep.subr.bf16.mxu0 0
    %304 = vmatpush1.bf16.msra.mxu0 0
    %305 = vmatprep.subr.bf16.mxu0 0
    %306 = vmatpush1.bf16.msra.mxu0 0
    %307 = vmatprep.mubr.bf16.mxu0 0
    %308 = vmatmul.mubr.bf16.gmra.mrb[0].mxu0 %v87
    %v309 = vpop.f32.mrb[0].mxu0
    %v310 = vadd.f32 0.0, %v309
    %v311 = vpop.f32.mrb[0].mxu0
    %v312 = vpop.f32.mrb[0].mxu0
    %v313 = vadd.f32 0.0, %v312
    %v314 = vpop.f32.mrb[0].mxu0
    %315 = vmatprep.mubr.bf16.mxu0 0
    %316 = vmatmul.mubr.bf16.gmra.mrb[0].mxu0 %v90
    %v317 = vpop.f32.mrb[0].mxu0
    %v318 = vadd.f32 0.0, %v317
    %v319 = vpop.f32.mrb[0].mxu0
    %v320 = vpop.f32.mrb[0].mxu0
    %v321 = vadd.f32 0.0, %v320
    %v322 = vpop.f32.mrb[0].mxu0
    %323 = vdwg.mxu0
    %v328 = vunpack.c.l.b16 %v41
    %v329 = vunpack.c.l.b16 %v42
    %v330 = vunpack.c.l.b16 %v43
    %v331 = vunpack.c.l.b16 %v44
    %v332 = vpack.c.b16 %v329, %v328
    %v333 = vpack.c.b16 %v331, %v330
    %336 = vmatprep.subr.bf16.mxu0 0
    %337 = vmatpush1.bf16.msra.mxu0 %v332
    %338 = vmatprep.subr.bf16.mxu0 0
    %339 = vmatpush1.bf16.msra.mxu0 %v333
    %340 = vmatprep.subr.bf16.mxu0 0
    %341 = vmatpush1.bf16.msra.mxu0 0
    %342 = vmatprep.subr.bf16.mxu0 0
    %343 = vmatpush1.bf16.msra.mxu0 0
    %344 = vmatprep.subr.bf16.mxu0 0
    %345 = vmatpush1.bf16.msra.mxu0 0
    %346 = vmatprep.subr.bf16.mxu0 0
    %347 = vmatpush1.bf16.msra.mxu0 0
    %348 = vmatprep.subr.bf16.mxu0 0
    %349 = vmatpush1.bf16.msra.mxu0 0
    %350 = vmatprep.subr.bf16.mxu0 0
    %351 = vmatpush1.bf16.msra.mxu0 0
    %352 = vmatprep.subr.bf16.mxu0 0
    %353 = vmatpush1.bf16.msra.mxu0 0
    %354 = vmatprep.subr.bf16.mxu0 0
    %355 = vmatpush1.bf16.msra.mxu0 0
    %356 = vmatprep.subr.bf16.mxu0 0
    %357 = vmatpush1.bf16.msra.mxu0 0
    %358 = vmatprep.subr.bf16.mxu0 0
    %359 = vmatpush1.bf16.msra.mxu0 0
    %360 = vmatprep.subr.bf16.mxu0 0
    %361 = vmatpush1.bf16.msra.mxu0 0
    %362 = vmatprep.subr.bf16.mxu0 0
    %363 = vmatpush1.bf16.msra.mxu0 0
    %364 = vmatprep.subr.bf16.mxu0 0
    %365 = vmatpush1.bf16.msra.mxu0 0
    %366 = vmatprep.subr.bf16.mxu0 0
    %367 = vmatpush1.bf16.msra.mxu0 0
    %368 = vmatprep.mubr.bf16.mxu0 0
    %369 = vmatmul.mubr.bf16.gmra.mrb[0].mxu0 %v87
    %v370 = vpop.f32.mrb[0].mxu0
    %v371 = vadd.f32 0.0, %v370
    %v372 = vpop.f32.mrb[0].mxu0
    %v373 = vpop.f32.mrb[0].mxu0
    %v374 = vadd.f32 0.0, %v373
    %v375 = vpop.f32.mrb[0].mxu0
    %376 = vmatprep.mubr.bf16.mxu0 0
    %377 = vmatmul.mubr.bf16.gmra.mrb[0].mxu0 %v90
    %v378 = vpop.f32.mrb[0].mxu0
    %v379 = vadd.f32 0.0, %v378
    %v380 = vpop.f32.mrb[0].mxu0
    %v381 = vpop.f32.mrb[0].mxu0
    %v382 = vadd.f32 0.0, %v381
    %v383 = vpop.f32.mrb[0].mxu0
    %384 = vdwg.mxu0
    %v389 = vunpack.c.l.b16 %v45
    %v390 = vunpack.c.l.b16 %v46
    %v391 = vunpack.c.l.b16 %v47
    %v392 = vunpack.c.l.b16 %v48
    %v393 = vpack.c.b16 %v390, %v389
    %v394 = vpack.c.b16 %v392, %v391
    %397 = vmatprep.subr.bf16.mxu0 0
    %398 = vmatpush1.bf16.msra.mxu0 %v393
    %399 = vmatprep.subr.bf16.mxu0 0
    %400 = vmatpush1.bf16.msra.mxu0 %v394
    %401 = vmatprep.subr.bf16.mxu0 0
    %402 = vmatpush1.bf16.msra.mxu0 0
    %403 = vmatprep.subr.bf16.mxu0 0
    %404 = vmatpush1.bf16.msra.mxu0 0
    %405 = vmatprep.subr.bf16.mxu0 0
    %406 = vmatpush1.bf16.msra.mxu0 0
    %407 = vmatprep.subr.bf16.mxu0 0
    %408 = vmatpush1.bf16.msra.mxu0 0
    %409 = vmatprep.subr.bf16.mxu0 0
    %410 = vmatpush1.bf16.msra.mxu0 0
    %411 = vmatprep.subr.bf16.mxu0 0
    %412 = vmatpush1.bf16.msra.mxu0 0
    %413 = vmatprep.subr.bf16.mxu0 0
    %414 = vmatpush1.bf16.msra.mxu0 0
    %415 = vmatprep.subr.bf16.mxu0 0
    %416 = vmatpush1.bf16.msra.mxu0 0
    %417 = vmatprep.subr.bf16.mxu0 0
    %418 = vmatpush1.bf16.msra.mxu0 0
    %419 = vmatprep.subr.bf16.mxu0 0
    %420 = vmatpush1.bf16.msra.mxu0 0
    %421 = vmatprep.subr.bf16.mxu0 0
    %422 = vmatpush1.bf16.msra.mxu0 0
    %423 = vmatprep.subr.bf16.mxu0 0
    %424 = vmatpush1.bf16.msra.mxu0 0
    %425 = vmatprep.subr.bf16.mxu0 0
    %426 = vmatpush1.bf16.msra.mxu0 0
    %427 = vmatprep.subr.bf16.mxu0 0
    %428 = vmatpush1.bf16.msra.mxu0 0
    %429 = vmatprep.mubr.bf16.mxu0 0
    %430 = vmatmul.mubr.bf16.gmra.mrb[0].mxu0 %v87
    %v431 = vpop.f32.mrb[0].mxu0
    %v432 = vadd.f32 0.0, %v431
    %v433 = vpop.f32.mrb[0].mxu0
    %v434 = vpop.f32.mrb[0].mxu0
    %v435 = vadd.f32 0.0, %v434
    %v436 = vpop.f32.mrb[0].mxu0
    %437 = vmatprep.mubr.bf16.mxu0 0
    %438 = vmatmul.mubr.bf16.gmra.mrb[0].mxu0 %v90
    %v439 = vpop.f32.mrb[0].mxu0
    %v440 = vadd.f32 0.0, %v439
    %v441 = vpop.f32.mrb[0].mxu0
    %v442 = vpop.f32.mrb[0].mxu0
    %v443 = vadd.f32 0.0, %v442
    %v444 = vpop.f32.mrb[0].mxu0
    %445 = vdwg.mxu0
    %v450 = vunpack.c.l.b16 %v49
    %v451 = vunpack.c.l.b16 %v50
    %v452 = vunpack.c.l.b16 %v51
    %v453 = vunpack.c.l.b16 %v52
    %v454 = vpack.c.b16 %v451, %v450
    %v455 = vpack.c.b16 %v453, %v452
    %458 = vmatprep.subr.bf16.mxu0 0
    %459 = vmatpush1.bf16.msra.mxu0 %v454
    %460 = vmatprep.subr.bf16.mxu0 0
    %461 = vmatpush1.bf16.msra.mxu0 %v455
    %462 = vmatprep.subr.bf16.mxu0 0
    %463 = vmatpush1.bf16.msra.mxu0 0
    %464 = vmatprep.subr.bf16.mxu0 0
    %465 = vmatpush1.bf16.msra.mxu0 0
    %466 = vmatprep.subr.bf16.mxu0 0
    %467 = vmatpush1.bf16.msra.mxu0 0
    %468 = vmatprep.subr.bf16.mxu0 0
    %469 = vmatpush1.bf16.msra.mxu0 0
    %470 = vmatprep.subr.bf16.mxu0 0
    %471 = vmatpush1.bf16.msra.mxu0 0
    %472 = vmatprep.subr.bf16.mxu0 0
    %473 = vmatpush1.bf16.msra.mxu0 0
    %474 = vmatprep.subr.bf16.mxu0 0
    %475 = vmatpush1.bf16.msra.mxu0 0
    %476 = vmatprep.subr.bf16.mxu0 0
    %477 = vmatpush1.bf16.msra.mxu0 0
    %478 = vmatprep.subr.bf16.mxu0 0
    %479 = vmatpush1.bf16.msra.mxu0 0
    %480 = vmatprep.subr.bf16.mxu0 0
    %481 = vmatpush1.bf16.msra.mxu0 0
    %482 = vmatprep.subr.bf16.mxu0 0
    %483 = vmatpush1.bf16.msra.mxu0 0
    %484 = vmatprep.subr.bf16.mxu0 0
    %485 = vmatpush1.bf16.msra.mxu0 0
    %486 = vmatprep.subr.bf16.mxu0 0
    %487 = vmatpush1.bf16.msra.mxu0 0
    %488 = vmatprep.subr.bf16.mxu0 0
    %489 = vmatpush1.bf16.msra.mxu0 0
    %490 = vmatprep.mubr.bf16.mxu0 0
    %491 = vmatmul.mubr.bf16.gmra.mrb[0].mxu0 %v87
    %v492 = vpop.f32.mrb[0].mxu0
    %v493 = vadd.f32 0.0, %v492
    %v494 = vpop.f32.mrb[0].mxu0
    %v495 = vpop.f32.mrb[0].mxu0
    %v496 = vadd.f32 0.0, %v495
    %v497 = vpop.f32.mrb[0].mxu0
    %498 = vmatprep.mubr.bf16.mxu0 0
    %499 = vmatmul.mubr.bf16.gmra.mrb[0].mxu0 %v90
    %v500 = vpop.f32.mrb[0].mxu0
    %v501 = vadd.f32 0.0, %v500
    %v502 = vpop.f32.mrb[0].mxu0
    %v503 = vpop.f32.mrb[0].mxu0
    %v504 = vadd.f32 0.0, %v503
    %v505 = vpop.f32.mrb[0].mxu0
    %506 = vdwg.mxu0
    %v511 = vunpack.c.l.b16 %v53
    %v512 = vunpack.c.l.b16 %v54
    %v513 = vunpack.c.l.b16 %v55
    %v514 = vunpack.c.l.b16 %v56
    %v515 = vpack.c.b16 %v512, %v511
    %v516 = vpack.c.b16 %v514, %v513
    %519 = vmatprep.subr.bf16.mxu0 0
    %520 = vmatpush1.bf16.msra.mxu0 %v515
    %521 = vmatprep.subr.bf16.mxu0 0
    %522 = vmatpush1.bf16.msra.mxu0 %v516
    %523 = vmatprep.subr.bf16.mxu0 0
    %524 = vmatpush1.bf16.msra.mxu0 0
    %525 = vmatprep.subr.bf16.mxu0 0
    %526 = vmatpush1.bf16.msra.mxu0 0
    %527 = vmatprep.subr.bf16.mxu0 0
    %528 = vmatpush1.bf16.msra.mxu0 0
    %529 = vmatprep.subr.bf16.mxu0 0
    %530 = vmatpush1.bf16.msra.mxu0 0
    %531 = vmatprep.subr.bf16.mxu0 0
    %532 = vmatpush1.bf16.msra.mxu0 0
    %533 = vmatprep.subr.bf16.mxu0 0
    %534 = vmatpush1.bf16.msra.mxu0 0
    %535 = vmatprep.subr.bf16.mxu0 0
    %536 = vmatpush1.bf16.msra.mxu0 0
    %537 = vmatprep.subr.bf16.mxu0 0
    %538 = vmatpush1.bf16.msra.mxu0 0
    %539 = vmatprep.subr.bf16.mxu0 0
    %540 = vmatpush1.bf16.msra.mxu0 0
    %541 = vmatprep.subr.bf16.mxu0 0
    %542 = vmatpush1.bf16.msra.mxu0 0
    %543 = vmatprep.subr.bf16.mxu0 0
    %544 = vmatpush1.bf16.msra.mxu0 0
    %545 = vmatprep.subr.bf16.mxu0 0
    %546 = vmatpush1.bf16.msra.mxu0 0
    %547 = vmatprep.subr.bf16.mxu0 0
    %548 = vmatpush1.bf16.msra.mxu0 0
    %549 = vmatprep.subr.bf16.mxu0 0
    %550 = vmatpush1.bf16.msra.mxu0 0
    %551 = vmatprep.mubr.bf16.mxu0 0
    %552 = vmatmul.mubr.bf16.gmra.mrb[0].mxu0 %v87
    %v553 = vpop.f32.mrb[0].mxu0
    %v554 = vadd.f32 0.0, %v553
    %v555 = vpop.f32.mrb[0].mxu0
    %v556 = vpop.f32.mrb[0].mxu0
    %v557 = vadd.f32 0.0, %v556
    %v558 = vpop.f32.mrb[0].mxu0
    %559 = vmatprep.mubr.bf16.mxu0 0
    %560 = vmatmul.mubr.bf16.gmra.mrb[0].mxu0 %v90
    %v561 = vpop.f32.mrb[0].mxu0
    %v562 = vadd.f32 0.0, %v561
    %v563 = vpop.f32.mrb[0].mxu0
    %v564 = vpop.f32.mrb[0].mxu0
    %v565 = vadd.f32 0.0, %v564
    %v566 = vpop.f32.mrb[0].mxu0
    %567 = vdwg.mxu0
    %v572 = vunpack.c.l.b16 %v57
    %v573 = vunpack.c.l.b16 %v58
    %v574 = vunpack.c.l.b16 %v59
    %v575 = vunpack.c.l.b16 %v60
    %v576 = vpack.c.b16 %v573, %v572
    %v577 = vpack.c.b16 %v575, %v574
    %580 = vmatprep.subr.bf16.mxu0 0
    %581 = vmatpush1.bf16.msra.mxu0 %v576
    %582 = vmatprep.subr.bf16.mxu0 0
    %583 = vmatpush1.bf16.msra.mxu0 %v577
    %584 = vmatprep.subr.bf16.mxu0 0
    %585 = vmatpush1.bf16.msra.mxu0 0
    %586 = vmatprep.subr.bf16.mxu0 0
    %587 = vmatpush1.bf16.msra.mxu0 0
    %588 = vmatprep.subr.bf16.mxu0 0
    %589 = vmatpush1.bf16.msra.mxu0 0
    %590 = vmatprep.subr.bf16.mxu0 0
    %591 = vmatpush1.bf16.msra.mxu0 0
    %592 = vmatprep.subr.bf16.mxu0 0
    %593 = vmatpush1.bf16.msra.mxu0 0
    %594 = vmatprep.subr.bf16.mxu0 0
    %595 = vmatpush1.bf16.msra.mxu0 0
    %596 = vmatprep.subr.bf16.mxu0 0
    %597 = vmatpush1.bf16.msra.mxu0 0
    %598 = vmatprep.subr.bf16.mxu0 0
    %599 = vmatpush1.bf16.msra.mxu0 0
    %600 = vmatprep.subr.bf16.mxu0 0
    %601 = vmatpush1.bf16.msra.mxu0 0
    %602 = vmatprep.subr.bf16.mxu0 0
    %603 = vmatpush1.bf16.msra.mxu0 0
    %604 = vmatprep.subr.bf16.mxu0 0
    %605 = vmatpush1.bf16.msra.mxu0 0
    %606 = vmatprep.subr.bf16.mxu0 0
    %607 = vmatpush1.bf16.msra.mxu0 0
    %608 = vmatprep.subr.bf16.mxu0 0
    %609 = vmatpush1.bf16.msra.mxu0 0
    %610 = vmatprep.subr.bf16.mxu0 0
    %611 = vmatpush1.bf16.msra.mxu0 0
    %612 = vmatprep.mubr.bf16.mxu0 0
    %613 = vmatmul.mubr.bf16.gmra.mrb[0].mxu0 %v87
    %v614 = vpop.f32.mrb[0].mxu0
    %v615 = vadd.f32 0.0, %v614
    %v616 = vpop.f32.mrb[0].mxu0
    %v617 = vpop.f32.mrb[0].mxu0
    %v618 = vadd.f32 0.0, %v617
    %v619 = vpop.f32.mrb[0].mxu0
    %620 = vmatprep.mubr.bf16.mxu0 0
    %621 = vmatmul.mubr.bf16.gmra.mrb[0].mxu0 %v90
    %v622 = vpop.f32.mrb[0].mxu0
    %v623 = vadd.f32 0.0, %v622
    %v624 = vpop.f32.mrb[0].mxu0
    %v625 = vpop.f32.mrb[0].mxu0
    %v626 = vadd.f32 0.0, %v625
    %v627 = vpop.f32.mrb[0].mxu0
    %628 = vdwg.mxu0
    %v633 = vunpack.c.l.b16 %v61
    %v634 = vunpack.c.l.b16 %v62
    %v635 = vunpack.c.l.b16 %v63
    %v636 = vunpack.c.l.b16 %v64
    %v637 = vpack.c.b16 %v634, %v633
    %v638 = vpack.c.b16 %v636, %v635
    %641 = vmatprep.subr.bf16.mxu0 0
    %642 = vmatpush1.bf16.msra.mxu0 %v637
    %643 = vmatprep.subr.bf16.mxu0 0
    %644 = vmatpush1.bf16.msra.mxu0 %v638
    %645 = vmatprep.subr.bf16.mxu0 0
    %646 = vmatpush1.bf16.msra.mxu0 0
    %647 = vmatprep.subr.bf16.mxu0 0
    %648 = vmatpush1.bf16.msra.mxu0 0
    %649 = vmatprep.subr.bf16.mxu0 0
    %650 = vmatpush1.bf16.msra.mxu0 0
    %651 = vmatprep.subr.bf16.mxu0 0
    %652 = vmatpush1.bf16.msra.mxu0 0
    %653 = vmatprep.subr.bf16.mxu0 0
    %654 = vmatpush1.bf16.msra.mxu0 0
    %655 = vmatprep.subr.bf16.mxu0 0
    %656 = vmatpush1.bf16.msra.mxu0 0
    %657 = vmatprep.subr.bf16.mxu0 0
    %658 = vmatpush1.bf16.msra.mxu0 0
    %659 = vmatprep.subr.bf16.mxu0 0
    %660 = vmatpush1.bf16.msra.mxu0 0
    %661 = vmatprep.subr.bf16.mxu0 0
    %662 = vmatpush1.bf16.msra.mxu0 0
    %663 = vmatprep.subr.bf16.mxu0 0
    %664 = vmatpush1.bf16.msra.mxu0 0
    %665 = vmatprep.subr.bf16.mxu0 0
    %666 = vmatpush1.bf16.msra.mxu0 0
    %667 = vmatprep.subr.bf16.mxu0 0
    %668 = vmatpush1.bf16.msra.mxu0 0
    %669 = vmatprep.subr.bf16.mxu0 0
    %670 = vmatpush1.bf16.msra.mxu0 0
    %671 = vmatprep.subr.bf16.mxu0 0
    %672 = vmatpush1.bf16.msra.mxu0 0
    %673 = vmatprep.mubr.bf16.mxu0 0
    %674 = vmatmul.mubr.bf16.gmra.mrb[0].mxu0 %v87
    %v675 = vpop.f32.mrb[0].mxu0
    %v676 = vadd.f32 0.0, %v675
    %v677 = vpop.f32.mrb[0].mxu0
    %v678 = vpop.f32.mrb[0].mxu0
    %v679 = vadd.f32 0.0, %v678
    %v680 = vpop.f32.mrb[0].mxu0
    %681 = vmatprep.mubr.bf16.mxu0 0
    %682 = vmatmul.mubr.bf16.gmra.mrb[0].mxu0 %v90
    %v683 = vpop.f32.mrb[0].mxu0
    %v684 = vadd.f32 0.0, %v683
    %v685 = vpop.f32.mrb[0].mxu0
    %v686 = vpop.f32.mrb[0].mxu0
    %v687 = vadd.f32 0.0, %v686
    %v688 = vpop.f32.mrb[0].mxu0
    %689 = vdwg.mxu0
    %v694 = vunpack.c.l.b16 %v65
    %v695 = vunpack.c.l.b16 %v66
    %v696 = vunpack.c.l.b16 %v67
    %v697 = vunpack.c.l.b16 %v68
    %v698 = vpack.c.b16 %v695, %v694
    %v699 = vpack.c.b16 %v697, %v696
    %702 = vmatprep.subr.bf16.mxu0 0
    %703 = vmatpush1.bf16.msra.mxu0 %v698
    %704 = vmatprep.subr.bf16.mxu0 0
    %705 = vmatpush1.bf16.msra.mxu0 %v699
    %706 = vmatprep.subr.bf16.mxu0 0
    %707 = vmatpush1.bf16.msra.mxu0 0
    %708 = vmatprep.subr.bf16.mxu0 0
    %709 = vmatpush1.bf16.msra.mxu0 0
    %710 = vmatprep.subr.bf16.mxu0 0
    %711 = vmatpush1.bf16.msra.mxu0 0
    %712 = vmatprep.subr.bf16.mxu0 0
    %713 = vmatpush1.bf16.msra.mxu0 0
    %714 = vmatprep.subr.bf16.mxu0 0
    %715 = vmatpush1.bf16.msra.mxu0 0
    %716 = vmatprep.subr.bf16.mxu0 0
    %717 = vmatpush1.bf16.msra.mxu0 0
    %718 = vmatprep.subr.bf16.mxu0 0
    %719 = vmatpush1.bf16.msra.mxu0 0
    %720 = vmatprep.subr.bf16.mxu0 0
    %721 = vmatpush1.bf16.msra.mxu0 0
    %722 = vmatprep.subr.bf16.mxu0 0
    %723 = vmatpush1.bf16.msra.mxu0 0
    %724 = vmatprep.subr.bf16.mxu0 0
    %725 = vmatpush1.bf16.msra.mxu0 0
    %726 = vmatprep.subr.bf16.mxu0 0
    %727 = vmatpush1.bf16.msra.mxu0 0
    %728 = vmatprep.subr.bf16.mxu0 0
    %729 = vmatpush1.bf16.msra.mxu0 0
    %730 = vmatprep.subr.bf16.mxu0 0
    %731 = vmatpush1.bf16.msra.mxu0 0
    %732 = vmatprep.subr.bf16.mxu0 0
    %733 = vmatpush1.bf16.msra.mxu0 0
    %734 = vmatprep.mubr.bf16.mxu0 0
    %735 = vmatmul.mubr.bf16.gmra.mrb[0].mxu0 %v87
    %v736 = vpop.f32.mrb[0].mxu0
    %v737 = vadd.f32 0.0, %v736
    %v738 = vpop.f32.mrb[0].mxu0
    %v739 = vpop.f32.mrb[0].mxu0
    %v740 = vadd.f32 0.0, %v739
    %v741 = vpop.f32.mrb[0].mxu0
    %742 = vmatprep.mubr.bf16.mxu0 0
    %743 = vmatmul.mubr.bf16.gmra.mrb[0].mxu0 %v90
    %v744 = vpop.f32.mrb[0].mxu0
    %v745 = vadd.f32 0.0, %v744
    %v746 = vpop.f32.mrb[0].mxu0
    %v747 = vpop.f32.mrb[0].mxu0
    %v748 = vadd.f32 0.0, %v747
    %v749 = vpop.f32.mrb[0].mxu0
    %750 = vdwg.mxu0
    %v755 = vunpack.c.l.b16 %v69
    %v756 = vunpack.c.l.b16 %v70
    %v757 = vunpack.c.l.b16 %v71
    %v758 = vunpack.c.l.b16 %v72
    %v759 = vpack.c.b16 %v756, %v755
    %v760 = vpack.c.b16 %v758, %v757
    %763 = vmatprep.subr.bf16.mxu0 0
    %764 = vmatpush1.bf16.msra.mxu0 %v759
    %765 = vmatprep.subr.bf16.mxu0 0
    %766 = vmatpush1.bf16.msra.mxu0 %v760
    %767 = vmatprep.subr.bf16.mxu0 0
    %768 = vmatpush1.bf16.msra.mxu0 0
    %769 = vmatprep.subr.bf16.mxu0 0
    %770 = vmatpush1.bf16.msra.mxu0 0
    %771 = vmatprep.subr.bf16.mxu0 0
    %772 = vmatpush1.bf16.msra.mxu0 0
    %773 = vmatprep.subr.bf16.mxu0 0
    %774 = vmatpush1.bf16.msra.mxu0 0
    %775 = vmatprep.subr.bf16.mxu0 0
    %776 = vmatpush1.bf16.msra.mxu0 0
    %777 = vmatprep.subr.bf16.mxu0 0
    %778 = vmatpush1.bf16.msra.mxu0 0
    %779 = vmatprep.subr.bf16.mxu0 0
    %780 = vmatpush1.bf16.msra.mxu0 0
    %781 = vmatprep.subr.bf16.mxu0 0
    %782 = vmatpush1.bf16.msra.mxu0 0
    %783 = vmatprep.subr.bf16.mxu0 0
    %784 = vmatpush1.bf16.msra.mxu0 0
    %785 = vmatprep.subr.bf16.mxu0 0
    %786 = vmatpush1.bf16.msra.mxu0 0
    %787 = vmatprep.subr.bf16.mxu0 0
    %788 = vmatpush1.bf16.msra.mxu0 0
    %789 = vmatprep.subr.bf16.mxu0 0
    %790 = vmatpush1.bf16.msra.mxu0 0
    %791 = vmatprep.subr.bf16.mxu0 0
    %792 = vmatpush1.bf16.msra.mxu0 0
    %793 = vmatprep.subr.bf16.mxu0 0
    %794 = vmatpush1.bf16.msra.mxu0 0
    %795 = vmatprep.mubr.bf16.mxu0 0
    %796 = vmatmul.mubr.bf16.gmra.mrb[0].mxu0 %v87
    %v797 = vpop.f32.mrb[0].mxu0
    %v798 = vadd.f32 0.0, %v797
    %v799 = vpop.f32.mrb[0].mxu0
    %v800 = vpop.f32.mrb[0].mxu0
    %v801 = vadd.f32 0.0, %v800
    %v802 = vpop.f32.mrb[0].mxu0
    %803 = vmatprep.mubr.bf16.mxu0 0
    %804 = vmatmul.mubr.bf16.gmra.mrb[0].mxu0 %v90
    %v805 = vpop.f32.mrb[0].mxu0
    %v806 = vadd.f32 0.0, %v805
    %v807 = vpop.f32.mrb[0].mxu0
    %v808 = vpop.f32.mrb[0].mxu0
    %v809 = vadd.f32 0.0, %v808
    %v810 = vpop.f32.mrb[0].mxu0
    %811 = vdwg.mxu0
    %v812 = vpack.c.bf16 %v130, %v127
    %v813 = vpack.c.bf16 %v138, %v135
    %v814 = vpack.c.bf16 %v191, %v188
    %v815 = vpack.c.bf16 %v199, %v196
    %v816 = vpack.c.bf16 %v252, %v249
    %v817 = vpack.c.bf16 %v260, %v257
    %v818 = vpack.c.bf16 %v313, %v310
    %v819 = vpack.c.bf16 %v321, %v318
    %v820 = vpack.c.bf16 %v374, %v371
    %v821 = vpack.c.bf16 %v382, %v379
    %v822 = vpack.c.bf16 %v435, %v432
    %v823 = vpack.c.bf16 %v443, %v440
    %v824 = vpack.c.bf16 %v496, %v493
    %v825 = vpack.c.bf16 %v504, %v501
    %v826 = vpack.c.bf16 %v557, %v554
    %v827 = vpack.c.bf16 %v565, %v562
    %v828 = vpack.c.bf16 %v618, %v615
    %v829 = vpack.c.bf16 %v626, %v623
    %v830 = vpack.c.bf16 %v679, %v676
    %v831 = vpack.c.bf16 %v687, %v684
    %v832 = vpack.c.bf16 %v740, %v737
    %v833 = vpack.c.bf16 %v748, %v745
    %v834 = vpack.c.bf16 %v801, %v798
    %v835 = vpack.c.bf16 %v809, %v806
    %v844 = vunpack.c.l.b16 %v812
    %v845 = vunpack.c.h.b16 %v812
    %v846 = vunpack.c.l.b16 %v813
    %v847 = vunpack.c.h.b16 %v813
    %v848 = vunpack.c.l.b16 %v814
    %v849 = vunpack.c.h.b16 %v814
    %v850 = vunpack.c.l.b16 %v815
    %v851 = vunpack.c.h.b16 %v815
    %v852 = vunpack.c.l.b16 %v816
    %v853 = vunpack.c.h.b16 %v816
    %v854 = vunpack.c.l.b16 %v817
    %v855 = vunpack.c.h.b16 %v817
    %v856 = vunpack.c.l.b16 %v818
    %v857 = vunpack.c.h.b16 %v818
    %v858 = vunpack.c.l.b16 %v819
    %v859 = vunpack.c.h.b16 %v819
    %v860 = vpack.c.b16 %v844, %v844
    %v861 = vpack.c.b16 %v845, %v845
    %v862 = vpack.c.b16 %v846, %v846
    %v863 = vpack.c.b16 %v847, %v847
    %v864 = vpack.c.b16 %v848, %v848
    %v865 = vpack.c.b16 %v849, %v849
    %v866 = vpack.c.b16 %v850, %v850
    %v867 = vpack.c.b16 %v851, %v851
    %v868 = vpack.c.b16 %v852, %v852
    %v869 = vpack.c.b16 %v853, %v853
    %v870 = vpack.c.b16 %v854, %v854
    %v871 = vpack.c.b16 %v855, %v855
    %v872 = vpack.c.b16 %v856, %v856
    %v873 = vpack.c.b16 %v857, %v857
    %v874 = vpack.c.b16 %v858, %v858
    %v875 = vpack.c.b16 %v859, %v859
    %v884 = vunpack.c.l.b16 %v820
    %v885 = vunpack.c.h.b16 %v820
    %v886 = vunpack.c.l.b16 %v821
    %v887 = vunpack.c.h.b16 %v821
    %v888 = vunpack.c.l.b16 %v822
    %v889 = vunpack.c.h.b16 %v822
    %v890 = vunpack.c.l.b16 %v823
    %v891 = vunpack.c.h.b16 %v823
    %v892 = vunpack.c.l.b16 %v824
    %v893 = vunpack.c.h.b16 %v824
    %v894 = vunpack.c.l.b16 %v825
    %v895 = vunpack.c.h.b16 %v825
    %v896 = vunpack.c.l.b16 %v826
    %v897 = vunpack.c.h.b16 %v826
    %v898 = vunpack.c.l.b16 %v827
    %v899 = vunpack.c.h.b16 %v827
    %v900 = vpack.c.b16 %v884, %v884
    %v901 = vpack.c.b16 %v885, %v885
    %v902 = vpack.c.b16 %v886, %v886
    %v903 = vpack.c.b16 %v887, %v887
    %v904 = vpack.c.b16 %v888, %v888
    %v905 = vpack.c.b16 %v889, %v889
    %v906 = vpack.c.b16 %v890, %v890
    %v907 = vpack.c.b16 %v891, %v891
    %v908 = vpack.c.b16 %v892, %v892
    %v909 = vpack.c.b16 %v893, %v893
    %v910 = vpack.c.b16 %v894, %v894
    %v911 = vpack.c.b16 %v895, %v895
    %v912 = vpack.c.b16 %v896, %v896
    %v913 = vpack.c.b16 %v897, %v897
    %v914 = vpack.c.b16 %v898, %v898
    %v915 = vpack.c.b16 %v899, %v899
    %v924 = vunpack.c.l.b16 %v828
    %v925 = vunpack.c.h.b16 %v828
    %v926 = vunpack.c.l.b16 %v829
    %v927 = vunpack.c.h.b16 %v829
    %v928 = vunpack.c.l.b16 %v830
    %v929 = vunpack.c.h.b16 %v830
    %v930 = vunpack.c.l.b16 %v831
    %v931 = vunpack.c.h.b16 %v831
    %v932 = vunpack.c.l.b16 %v832
    %v933 = vunpack.c.h.b16 %v832
    %v934 = vunpack.c.l.b16 %v833
    %v935 = vunpack.c.h.b16 %v833
    %v936 = vunpack.c.l.b16 %v834
    %v937 = vunpack.c.h.b16 %v834
    %v938 = vunpack.c.l.b16 %v835
    %v939 = vunpack.c.h.b16 %v835
    %v940 = vpack.c.b16 %v924, %v924
    %v941 = vpack.c.b16 %v925, %v925
    %v942 = vpack.c.b16 %v926, %v926
    %v943 = vpack.c.b16 %v927, %v927
    %v944 = vpack.c.b16 %v928, %v928
    %v945 = vpack.c.b16 %v929, %v929
    %v946 = vpack.c.b16 %v930, %v930
    %v947 = vpack.c.b16 %v931, %v931
    %v948 = vpack.c.b16 %v932, %v932
    %v949 = vpack.c.b16 %v933, %v933
    %v950 = vpack.c.b16 %v934, %v934
    %v951 = vpack.c.b16 %v935, %v935
    %v952 = vpack.c.b16 %v936, %v936
    %v953 = vpack.c.b16 %v937, %v937
    %v954 = vpack.c.b16 %v938, %v938
    %v955 = vpack.c.b16 %v939, %v939
    %vm956 = vcmask 130048
    %v958 = vsel %vm956, %v860, 0
    %v961 = vsel %vm956, %v900, 0
    %963 = vmatprep.subr.bf16.mxu0 0
    %964 = vmatpush1.bf16.xpose.msra.mxu0 %v961
    %965 = vmatprep.subr.bf16.mxu0 0
    %966 = vmatpush1.bf16.xpose.msra.mxu0 0
    %967 = vmatprep.subr.bf16.mxu0 0
    %968 = vmatpush1.bf16.xpose.msra.mxu0 0
    %969 = vmatprep.subr.bf16.mxu0 0
    %970 = vmatpush1.bf16.xpose.msra.mxu0 0
    %971 = vmatprep.subr.bf16.mxu0 0
    %972 = vmatpush1.bf16.xpose.msra.mxu0 0
    %973 = vmatprep.subr.bf16.mxu0 0
    %974 = vmatpush1.bf16.xpose.msra.mxu0 0
    %975 = vmatprep.subr.bf16.mxu0 0
    %976 = vmatpush1.bf16.xpose.msra.mxu0 0
    %977 = vmatprep.subr.bf16.mxu0 0
    %978 = vmatpush1.bf16.xpose.msra.mxu0 0
    %979 = vmatprep.subr.bf16.mxu0 0
    %980 = vmatpush1.bf16.xpose.msra.mxu0 0
    %981 = vmatprep.subr.bf16.mxu0 0
    %982 = vmatpush1.bf16.xpose.msra.mxu0 0
    %983 = vmatprep.subr.bf16.mxu0 0
    %984 = vmatpush1.bf16.xpose.msra.mxu0 0
    %985 = vmatprep.subr.bf16.mxu0 0
    %986 = vmatpush1.bf16.xpose.msra.mxu0 0
    %987 = vmatprep.subr.bf16.mxu0 0
    %988 = vmatpush1.bf16.xpose.msra.mxu0 0
    %989 = vmatprep.subr.bf16.mxu0 0
    %990 = vmatpush1.bf16.xpose.msra.mxu0 0
    %991 = vmatprep.subr.bf16.mxu0 0
    %992 = vmatpush1.bf16.xpose.msra.mxu0 0
    %993 = vmatprep.subr.bf16.mxu0 0
    %994 = vmatpush1.bf16.xpose.msra.mxu0 0
    %995 = vmatprep.mubr.bf16.mxu0 0
    %996 = vmatmul.mubr.bf16.gmra.mrb[0].mxu0 %v958
    %v997 = vpop.f32.mrb[0].mxu0
    %v998 = vadd.f32 0.0, %v997
    %v999 = vpop.f32.mrb[0].mxu0
    %v1000 = vpop.f32.mrb[0].mxu0
    %v1001 = vpop.f32.mrb[0].mxu0
    %1002 = vdwg.mxu0
    %v1004 = vsel %vm956, %v861, 0
    %v1007 = vsel %vm956, %v901, 0
    %1009 = vmatprep.subr.bf16.mxu0 0
    %1010 = vmatpush1.bf16.xpose.msra.mxu0 %v1007
    %1011 = vmatprep.subr.bf16.mxu0 0
    %1012 = vmatpush1.bf16.xpose.msra.mxu0 0
    %1013 = vmatprep.subr.bf16.mxu0 0
    %1014 = vmatpush1.bf16.xpose.msra.mxu0 0
    %1015 = vmatprep.subr.bf16.mxu0 0
    %1016 = vmatpush1.bf16.xpose.msra.mxu0 0
    %1017 = vmatprep.subr.bf16.mxu0 0
    %1018 = vmatpush1.bf16.xpose.msra.mxu0 0
    %1019 = vmatprep.subr.bf16.mxu0 0
    %1020 = vmatpush1.bf16.xpose.msra.mxu0 0
    %1021 = vmatprep.subr.bf16.mxu0 0
    %1022 = vmatpush1.bf16.xpose.msra.mxu0 0
    %1023 = vmatprep.subr.bf16.mxu0 0
    %1024 = vmatpush1.bf16.xpose.msra.mxu0 0
    %1025 = vmatprep.subr.bf16.mxu0 0
    %1026 = vmatpush1.bf16.xpose.msra.mxu0 0
    %1027 = vmatprep.subr.bf16.mxu0 0
    %1028 = vmatpush1.bf16.xpose.msra.mxu0 0
    %1029 = vmatprep.subr.bf16.mxu0 0
    %1030 = vmatpush1.bf16.xpose.msra.mxu0 0
    %1031 = vmatprep.subr.bf16.mxu0 0
    %1032 = vmatpush1.bf16.xpose.msra.mxu0 0
    %1033 = vmatprep.subr.bf16.mxu0 0
    %1034 = vmatpush1.bf16.xpose.msra.mxu0 0
    %1035 = vmatprep.subr.bf16.mxu0 0
    %1036 = vmatpush1.bf16.xpose.msra.mxu0 0
    %1037 = vmatprep.subr.bf16.mxu0 0
    %1038 = vmatpush1.bf16.xpose.msra.mxu0 0
    %1039 = vmatprep.subr.bf16.mxu0 0
    %1040 = vmatpush1.bf16.xpose.msra.mxu0 0
    %1041 = vmatprep.mubr.bf16.mxu0 0
    %1042 = vmatmul.mubr.bf16.gmra.mrb[0].mxu0 %v1004
    %v1043 = vpop.f32.mrb[0].mxu0
    %v1044 = vadd.f32 0.0, %v1043
    %v1045 = vpop.f32.mrb[0].mxu0
    %v1046 = vpop.f32.mrb[0].mxu0
    %v1047 = vpop.f32.mrb[0].mxu0
    %1048 = vdwg.mxu0
    %v1050 = vsel %vm956, %v862, 0
    %v1053 = vsel %vm956, %v902, 0
    %1055 = vmatprep.subr.bf16.mxu0 0
    %1056 = vmatpush1.bf16.xpose.msra.mxu0 %v1053
    %1057 = vmatprep.subr.bf16.mxu0 0
    %1058 = vmatpush1.bf16.xpose.msra.mxu0 0
    %1059 = vmatprep.subr.bf16.mxu0 0
    %1060 = vmatpush1.bf16.xpose.msra.mxu0 0
    %1061 = vmatprep.subr.bf16.mxu0 0
    %1062 = vmatpush1.bf16.xpose.msra.mxu0 0
    %1063 = vmatprep.subr.bf16.mxu0 0
    %1064 = vmatpush1.bf16.xpose.msra.mxu0 0
    %1065 = vmatprep.subr.bf16.mxu0 0
    %1066 = vmatpush1.bf16.xpose.msra.mxu0 0
    %1067 = vmatprep.subr.bf16.mxu0 0
    %1068 = vmatpush1.bf16.xpose.msra.mxu0 0
    %1069 = vmatprep.subr.bf16.mxu0 0
    %1070 = vmatpush1.bf16.xpose.msra.mxu0 0
    %1071 = vmatprep.subr.bf16.mxu0 0
    %1072 = vmatpush1.bf16.xpose.msra.mxu0 0
    %1073 = vmatprep.subr.bf16.mxu0 0
    %1074 = vmatpush1.bf16.xpose.msra.mxu0 0
    %1075 = vmatprep.subr.bf16.mxu0 0
    %1076 = vmatpush1.bf16.xpose.msra.mxu0 0
    %1077 = vmatprep.subr.bf16.mxu0 0
    %1078 = vmatpush1.bf16.xpose.msra.mxu0 0
    %1079 = vmatprep.subr.bf16.mxu0 0
    %1080 = vmatpush1.bf16.xpose.msra.mxu0 0
    %1081 = vmatprep.subr.bf16.mxu0 0
    %1082 = vmatpush1.bf16.xpose.msra.mxu0 0
    %1083 = vmatprep.subr.bf16.mxu0 0
    %1084 = vmatpush1.bf16.xpose.msra.mxu0 0
    %1085 = vmatprep.subr.bf16.mxu0 0
    %1086 = vmatpush1.bf16.xpose.msra.mxu0 0
    %1087 = vmatprep.mubr.bf16.mxu0 0
    %1088 = vmatmul.mubr.bf16.gmra.mrb[0].mxu0 %v1050
    %v1089 = vpop.f32.mrb[0].mxu0
    %v1090 = vadd.f32 0.0, %v1089
    %v1091 = vpop.f32.mrb[0].mxu0
    %v1092 = vpop.f32.mrb[0].mxu0
    %v1093 = vpop.f32.mrb[0].mxu0
    %1094 = vdwg.mxu0
    %v1096 = vsel %vm956, %v863, 0
    %v1099 = vsel %vm956, %v903, 0
    %1101 = vmatprep.subr.bf16.mxu0 0
    %1102 = vmatpush1.bf16.xpose.msra.mxu0 %v1099
    %1103 = vmatprep.subr.bf16.mxu0 0
    %1104 = vmatpush1.bf16.xpose.msra.mxu0 0
    %1105 = vmatprep.subr.bf16.mxu0 0
    %1106 = vmatpush1.bf16.xpose.msra.mxu0 0
    %1107 = vmatprep.subr.bf16.mxu0 0
    %1108 = vmatpush1.bf16.xpose.msra.mxu0 0
    %1109 = vmatprep.subr.bf16.mxu0 0
    %1110 = vmatpush1.bf16.xpose.msra.mxu0 0
    %1111 = vmatprep.subr.bf16.mxu0 0
    %1112 = vmatpush1.bf16.xpose.msra.mxu0 0
    %1113 = vmatprep.subr.bf16.mxu0 0
    %1114 = vmatpush1.bf16.xpose.msra.mxu0 0
    %1115 = vmatprep.subr.bf16.mxu0 0
    %1116 = vmatpush1.bf16.xpose.msra.mxu0 0
    %1117 = vmatprep.subr.bf16.mxu0 0
    %1118 = vmatpush1.bf16.xpose.msra.mxu0 0
    %1119 = vmatprep.subr.bf16.mxu0 0
    %1120 = vmatpush1.bf16.xpose.msra.mxu0 0
    %1121 = vmatprep.subr.bf16.mxu0 0
    %1122 = vmatpush1.bf16.xpose.msra.mxu0 0
    %1123 = vmatprep.subr.bf16.mxu0 0
    %1124 = vmatpush1.bf16.xpose.msra.mxu0 0
    %1125 = vmatprep.subr.bf16.mxu0 0
    %1126 = vmatpush1.bf16.xpose.msra.mxu0 0
    %1127 = vmatprep.subr.bf16.mxu0 0
    %1128 = vmatpush1.bf16.xpose.msra.mxu0 0
    %1129 = vmatprep.subr.bf16.mxu0 0
    %1130 = vmatpush1.bf16.xpose.msra.mxu0 0
    %1131 = vmatprep.subr.bf16.mxu0 0
    %1132 = vmatpush1.bf16.xpose.msra.mxu0 0
    %1133 = vmatprep.mubr.bf16.mxu0 0
    %1134 = vmatmul.mubr.bf16.gmra.mrb[0].mxu0 %v1096
    %v1135 = vpop.f32.mrb[0].mxu0
    %v1136 = vadd.f32 0.0, %v1135
    %v1137 = vpop.f32.mrb[0].mxu0
    %v1138 = vpop.f32.mrb[0].mxu0
    %v1139 = vpop.f32.mrb[0].mxu0
    %1140 = vdwg.mxu0
    %v1142 = vsel %vm956, %v864, 0
    %v1145 = vsel %vm956, %v904, 0
    %1147 = vmatprep.subr.bf16.mxu0 0
    %1148 = vmatpush1.bf16.xpose.msra.mxu0 %v1145
    %1149 = vmatprep.subr.bf16.mxu0 0
    %1150 = vmatpush1.bf16.xpose.msra.mxu0 0
    %1151 = vmatprep.subr.bf16.mxu0 0
    %1152 = vmatpush1.bf16.xpose.msra.mxu0 0
    %1153 = vmatprep.subr.bf16.mxu0 0
    %1154 = vmatpush1.bf16.xpose.msra.mxu0 0
    %1155 = vmatprep.subr.bf16.mxu0 0
    %1156 = vmatpush1.bf16.xpose.msra.mxu0 0
    %1157 = vmatprep.subr.bf16.mxu0 0
    %1158 = vmatpush1.bf16.xpose.msra.mxu0 0
    %1159 = vmatprep.subr.bf16.mxu0 0
    %1160 = vmatpush1.bf16.xpose.msra.mxu0 0
    %1161 = vmatprep.subr.bf16.mxu0 0
    %1162 = vmatpush1.bf16.xpose.msra.mxu0 0
    %1163 = vmatprep.subr.bf16.mxu0 0
    %1164 = vmatpush1.bf16.xpose.msra.mxu0 0
    %1165 = vmatprep.subr.bf16.mxu0 0
    %1166 = vmatpush1.bf16.xpose.msra.mxu0 0
    %1167 = vmatprep.subr.bf16.mxu0 0
    %1168 = vmatpush1.bf16.xpose.msra.mxu0 0
    %1169 = vmatprep.subr.bf16.mxu0 0
    %1170 = vmatpush1.bf16.xpose.msra.mxu0 0
    %1171 = vmatprep.subr.bf16.mxu0 0
    %1172 = vmatpush1.bf16.xpose.msra.mxu0 0
    %1173 = vmatprep.subr.bf16.mxu0 0
    %1174 = vmatpush1.bf16.xpose.msra.mxu0 0
    %1175 = vmatprep.subr.bf16.mxu0 0
    %1176 = vmatpush1.bf16.xpose.msra.mxu0 0
    %1177 = vmatprep.subr.bf16.mxu0 0
    %1178 = vmatpush1.bf16.xpose.msra.mxu0 0
    %1179 = vmatprep.mubr.bf16.mxu0 0
    %1180 = vmatmul.mubr.bf16.gmra.mrb[0].mxu0 %v1142
    %v1181 = vpop.f32.mrb[0].mxu0
    %v1182 = vadd.f32 0.0, %v1181
    %v1183 = vpop.f32.mrb[0].mxu0
    %v1184 = vpop.f32.mrb[0].mxu0
    %v1185 = vpop.f32.mrb[0].mxu0
    %1186 = vdwg.mxu0
    %v1188 = vsel %vm956, %v865, 0
    %v1191 = vsel %vm956, %v905, 0
    %1193 = vmatprep.subr.bf16.mxu0 0
    %1194 = vmatpush1.bf16.xpose.msra.mxu0 %v1191
    %1195 = vmatprep.subr.bf16.mxu0 0
    %1196 = vmatpush1.bf16.xpose.msra.mxu0 0
    %1197 = vmatprep.subr.bf16.mxu0 0
    %1198 = vmatpush1.bf16.xpose.msra.mxu0 0
    %1199 = vmatprep.subr.bf16.mxu0 0
    %1200 = vmatpush1.bf16.xpose.msra.mxu0 0
    %1201 = vmatprep.subr.bf16.mxu0 0
    %1202 = vmatpush1.bf16.xpose.msra.mxu0 0
    %1203 = vmatprep.subr.bf16.mxu0 0
    %1204 = vmatpush1.bf16.xpose.msra.mxu0 0
    %1205 = vmatprep.subr.bf16.mxu0 0
    %1206 = vmatpush1.bf16.xpose.msra.mxu0 0
    %1207 = vmatprep.subr.bf16.mxu0 0
    %1208 = vmatpush1.bf16.xpose.msra.mxu0 0
    %1209 = vmatprep.subr.bf16.mxu0 0
    %1210 = vmatpush1.bf16.xpose.msra.mxu0 0
    %1211 = vmatprep.subr.bf16.mxu0 0
    %1212 = vmatpush1.bf16.xpose.msra.mxu0 0
    %1213 = vmatprep.subr.bf16.mxu0 0
    %1214 = vmatpush1.bf16.xpose.msra.mxu0 0
    %1215 = vmatprep.subr.bf16.mxu0 0
    %1216 = vmatpush1.bf16.xpose.msra.mxu0 0
    %1217 = vmatprep.subr.bf16.mxu0 0
    %1218 = vmatpush1.bf16.xpose.msra.mxu0 0
    %1219 = vmatprep.subr.bf16.mxu0 0
    %1220 = vmatpush1.bf16.xpose.msra.mxu0 0
    %1221 = vmatprep.subr.bf16.mxu0 0
    %1222 = vmatpush1.bf16.xpose.msra.mxu0 0
    %1223 = vmatprep.subr.bf16.mxu0 0
    %1224 = vmatpush1.bf16.xpose.msra.mxu0 0
    %1225 = vmatprep.mubr.bf16.mxu0 0
    %1226 = vmatmul.mubr.bf16.gmra.mrb[0].mxu0 %v1188
    %v1227 = vpop.f32.mrb[0].mxu0
    %v1228 = vadd.f32 0.0, %v1227
    %v1229 = vpop.f32.mrb[0].mxu0
    %v1230 = vpop.f32.mrb[0].mxu0
    %v1231 = vpop.f32.mrb[0].mxu0
    %1232 = vdwg.mxu0
    %v1234 = vsel %vm956, %v866, 0
    %v1237 = vsel %vm956, %v906, 0
    %1239 = vmatprep.subr.bf16.mxu0 0
    %1240 = vmatpush1.bf16.xpose.msra.mxu0 %v1237
    %1241 = vmatprep.subr.bf16.mxu0 0
    %1242 = vmatpush1.bf16.xpose.msra.mxu0 0
    %1243 = vmatprep.subr.bf16.mxu0 0
    %1244 = vmatpush1.bf16.xpose.msra.mxu0 0
    %1245 = vmatprep.subr.bf16.mxu0 0
    %1246 = vmatpush1.bf16.xpose.msra.mxu0 0
    %1247 = vmatprep.subr.bf16.mxu0 0
    %1248 = vmatpush1.bf16.xpose.msra.mxu0 0
    %1249 = vmatprep.subr.bf16.mxu0 0
    %1250 = vmatpush1.bf16.xpose.msra.mxu0 0
    %1251 = vmatprep.subr.bf16.mxu0 0
    %1252 = vmatpush1.bf16.xpose.msra.mxu0 0
    %1253 = vmatprep.subr.bf16.mxu0 0
    %1254 = vmatpush1.bf16.xpose.msra.mxu0 0
    %1255 = vmatprep.subr.bf16.mxu0 0
    %1256 = vmatpush1.bf16.xpose.msra.mxu0 0
    %1257 = vmatprep.subr.bf16.mxu0 0
    %1258 = vmatpush1.bf16.xpose.msra.mxu0 0
    %1259 = vmatprep.subr.bf16.mxu0 0
    %1260 = vmatpush1.bf16.xpose.msra.mxu0 0
    %1261 = vmatprep.subr.bf16.mxu0 0
    %1262 = vmatpush1.bf16.xpose.msra.mxu0 0
    %1263 = vmatprep.subr.bf16.mxu0 0
    %1264 = vmatpush1.bf16.xpose.msra.mxu0 0
    %1265 = vmatprep.subr.bf16.mxu0 0
    %1266 = vmatpush1.bf16.xpose.msra.mxu0 0
    %1267 = vmatprep.subr.bf16.mxu0 0
    %1268 = vmatpush1.bf16.xpose.msra.mxu0 0
    %1269 = vmatprep.subr.bf16.mxu0 0
    %1270 = vmatpush1.bf16.xpose.msra.mxu0 0
    %1271 = vmatprep.mubr.bf16.mxu0 0
    %1272 = vmatmul.mubr.bf16.gmra.mrb[0].mxu0 %v1234
    %v1273 = vpop.f32.mrb[0].mxu0
    %v1274 = vadd.f32 0.0, %v1273
    %v1275 = vpop.f32.mrb[0].mxu0
    %v1276 = vpop.f32.mrb[0].mxu0
    %v1277 = vpop.f32.mrb[0].mxu0
    %1278 = vdwg.mxu0
    %v1280 = vsel %vm956, %v867, 0
    %v1283 = vsel %vm956, %v907, 0
    %1285 = vmatprep.subr.bf16.mxu0 0
    %1286 = vmatpush1.bf16.xpose.msra.mxu0 %v1283
    %1287 = vmatprep.subr.bf16.mxu0 0
    %1288 = vmatpush1.bf16.xpose.msra.mxu0 0
    %1289 = vmatprep.subr.bf16.mxu0 0
    %1290 = vmatpush1.bf16.xpose.msra.mxu0 0
    %1291 = vmatprep.subr.bf16.mxu0 0
    %1292 = vmatpush1.bf16.xpose.msra.mxu0 0
    %1293 = vmatprep.subr.bf16.mxu0 0
    %1294 = vmatpush1.bf16.xpose.msra.mxu0 0
    %1295 = vmatprep.subr.bf16.mxu0 0
    %1296 = vmatpush1.bf16.xpose.msra.mxu0 0
    %1297 = vmatprep.subr.bf16.mxu0 0
    %1298 = vmatpush1.bf16.xpose.msra.mxu0 0
    %1299 = vmatprep.subr.bf16.mxu0 0
    %1300 = vmatpush1.bf16.xpose.msra.mxu0 0
    %1301 = vmatprep.subr.bf16.mxu0 0
    %1302 = vmatpush1.bf16.xpose.msra.mxu0 0
    %1303 = vmatprep.subr.bf16.mxu0 0
    %1304 = vmatpush1.bf16.xpose.msra.mxu0 0
    %1305 = vmatprep.subr.bf16.mxu0 0
    %1306 = vmatpush1.bf16.xpose.msra.mxu0 0
    %1307 = vmatprep.subr.bf16.mxu0 0
    %1308 = vmatpush1.bf16.xpose.msra.mxu0 0
    %1309 = vmatprep.subr.bf16.mxu0 0
    %1310 = vmatpush1.bf16.xpose.msra.mxu0 0
    %1311 = vmatprep.subr.bf16.mxu0 0
    %1312 = vmatpush1.bf16.xpose.msra.mxu0 0
    %1313 = vmatprep.subr.bf16.mxu0 0
    %1314 = vmatpush1.bf16.xpose.msra.mxu0 0
    %1315 = vmatprep.subr.bf16.mxu0 0
    %1316 = vmatpush1.bf16.xpose.msra.mxu0 0
    %1317 = vmatprep.mubr.bf16.mxu0 0
    %1318 = vmatmul.mubr.bf16.gmra.mrb[0].mxu0 %v1280
    %v1319 = vpop.f32.mrb[0].mxu0
    %v1320 = vadd.f32 0.0, %v1319
    %v1321 = vpop.f32.mrb[0].mxu0
    %v1322 = vpop.f32.mrb[0].mxu0
    %v1323 = vpop.f32.mrb[0].mxu0
    %1324 = vdwg.mxu0
    %v1326 = vsel %vm956, %v868, 0
    %v1329 = vsel %vm956, %v908, 0
    %1331 = vmatprep.subr.bf16.mxu0 0
    %1332 = vmatpush1.bf16.xpose.msra.mxu0 %v1329
    %1333 = vmatprep.subr.bf16.mxu0 0
    %1334 = vmatpush1.bf16.xpose.msra.mxu0 0
    %1335 = vmatprep.subr.bf16.mxu0 0
    %1336 = vmatpush1.bf16.xpose.msra.mxu0 0
    %1337 = vmatprep.subr.bf16.mxu0 0
    %1338 = vmatpush1.bf16.xpose.msra.mxu0 0
    %1339 = vmatprep.subr.bf16.mxu0 0
    %1340 = vmatpush1.bf16.xpose.msra.mxu0 0
    %1341 = vmatprep.subr.bf16.mxu0 0
    %1342 = vmatpush1.bf16.xpose.msra.mxu0 0
    %1343 = vmatprep.subr.bf16.mxu0 0
    %1344 = vmatpush1.bf16.xpose.msra.mxu0 0
    %1345 = vmatprep.subr.bf16.mxu0 0
    %1346 = vmatpush1.bf16.xpose.msra.mxu0 0
    %1347 = vmatprep.subr.bf16.mxu0 0
    %1348 = vmatpush1.bf16.xpose.msra.mxu0 0
    %1349 = vmatprep.subr.bf16.mxu0 0
    %1350 = vmatpush1.bf16.xpose.msra.mxu0 0
    %1351 = vmatprep.subr.bf16.mxu0 0
    %1352 = vmatpush1.bf16.xpose.msra.mxu0 0
    %1353 = vmatprep.subr.bf16.mxu0 0
    %1354 = vmatpush1.bf16.xpose.msra.mxu0 0
    %1355 = vmatprep.subr.bf16.mxu0 0
    %1356 = vmatpush1.bf16.xpose.msra.mxu0 0
    %1357 = vmatprep.subr.bf16.mxu0 0
    %1358 = vmatpush1.bf16.xpose.msra.mxu0 0
    %1359 = vmatprep.subr.bf16.mxu0 0
    %1360 = vmatpush1.bf16.xpose.msra.mxu0 0
    %1361 = vmatprep.subr.bf16.mxu0 0
    %1362 = vmatpush1.bf16.xpose.msra.mxu0 0
    %1363 = vmatprep.mubr.bf16.mxu0 0
    %1364 = vmatmul.mubr.bf16.gmra.mrb[0].mxu0 %v1326
    %v1365 = vpop.f32.mrb[0].mxu0
    %v1366 = vadd.f32 0.0, %v1365
    %v1367 = vpop.f32.mrb[0].mxu0
    %v1368 = vpop.f32.mrb[0].mxu0
    %v1369 = vpop.f32.mrb[0].mxu0
    %1370 = vdwg.mxu0
    %v1372 = vsel %vm956, %v869, 0
    %v1375 = vsel %vm956, %v909, 0
    %1377 = vmatprep.subr.bf16.mxu0 0
    %1378 = vmatpush1.bf16.xpose.msra.mxu0 %v1375
    %1379 = vmatprep.subr.bf16.mxu0 0
    %1380 = vmatpush1.bf16.xpose.msra.mxu0 0
    %1381 = vmatprep.subr.bf16.mxu0 0
    %1382 = vmatpush1.bf16.xpose.msra.mxu0 0
    %1383 = vmatprep.subr.bf16.mxu0 0
    %1384 = vmatpush1.bf16.xpose.msra.mxu0 0
    %1385 = vmatprep.subr.bf16.mxu0 0
    %1386 = vmatpush1.bf16.xpose.msra.mxu0 0
    %1387 = vmatprep.subr.bf16.mxu0 0
    %1388 = vmatpush1.bf16.xpose.msra.mxu0 0
    %1389 = vmatprep.subr.bf16.mxu0 0
    %1390 = vmatpush1.bf16.xpose.msra.mxu0 0
    %1391 = vmatprep.subr.bf16.mxu0 0
    %1392 = vmatpush1.bf16.xpose.msra.mxu0 0
    %1393 = vmatprep.subr.bf16.mxu0 0
    %1394 = vmatpush1.bf16.xpose.msra.mxu0 0
    %1395 = vmatprep.subr.bf16.mxu0 0
    %1396 = vmatpush1.bf16.xpose.msra.mxu0 0
    %1397 = vmatprep.subr.bf16.mxu0 0
    %1398 = vmatpush1.bf16.xpose.msra.mxu0 0
    %1399 = vmatprep.subr.bf16.mxu0 0
    %1400 = vmatpush1.bf16.xpose.msra.mxu0 0
    %1401 = vmatprep.subr.bf16.mxu0 0
    %1402 = vmatpush1.bf16.xpose.msra.mxu0 0
    %1403 = vmatprep.subr.bf16.mxu0 0
    %1404 = vmatpush1.bf16.xpose.msra.mxu0 0
    %1405 = vmatprep.subr.bf16.mxu0 0
    %1406 = vmatpush1.bf16.xpose.msra.mxu0 0
    %1407 = vmatprep.subr.bf16.mxu0 0
    %1408 = vmatpush1.bf16.xpose.msra.mxu0 0
    %1409 = vmatprep.mubr.bf16.mxu0 0
    %1410 = vmatmul.mubr.bf16.gmra.mrb[0].mxu0 %v1372
    %v1411 = vpop.f32.mrb[0].mxu0
    %v1412 = vadd.f32 0.0, %v1411
    %v1413 = vpop.f32.mrb[0].mxu0
    %v1414 = vpop.f32.mrb[0].mxu0
    %v1415 = vpop.f32.mrb[0].mxu0
    %1416 = vdwg.mxu0
    %v1418 = vsel %vm956, %v870, 0
    %v1421 = vsel %vm956, %v910, 0
    %1423 = vmatprep.subr.bf16.mxu0 0
    %1424 = vmatpush1.bf16.xpose.msra.mxu0 %v1421
    %1425 = vmatprep.subr.bf16.mxu0 0
    %1426 = vmatpush1.bf16.xpose.msra.mxu0 0
    %1427 = vmatprep.subr.bf16.mxu0 0
    %1428 = vmatpush1.bf16.xpose.msra.mxu0 0
    %1429 = vmatprep.subr.bf16.mxu0 0
    %1430 = vmatpush1.bf16.xpose.msra.mxu0 0
    %1431 = vmatprep.subr.bf16.mxu0 0
    %1432 = vmatpush1.bf16.xpose.msra.mxu0 0
    %1433 = vmatprep.subr.bf16.mxu0 0
    %1434 = vmatpush1.bf16.xpose.msra.mxu0 0
    %1435 = vmatprep.subr.bf16.mxu0 0
    %1436 = vmatpush1.bf16.xpose.msra.mxu0 0
    %1437 = vmatprep.subr.bf16.mxu0 0
    %1438 = vmatpush1.bf16.xpose.msra.mxu0 0
    %1439 = vmatprep.subr.bf16.mxu0 0
    %1440 = vmatpush1.bf16.xpose.msra.mxu0 0
    %1441 = vmatprep.subr.bf16.mxu0 0
    %1442 = vmatpush1.bf16.xpose.msra.mxu0 0
    %1443 = vmatprep.subr.bf16.mxu0 0
    %1444 = vmatpush1.bf16.xpose.msra.mxu0 0
    %1445 = vmatprep.subr.bf16.mxu0 0
    %1446 = vmatpush1.bf16.xpose.msra.mxu0 0
    %1447 = vmatprep.subr.bf16.mxu0 0
    %1448 = vmatpush1.bf16.xpose.msra.mxu0 0
    %1449 = vmatprep.subr.bf16.mxu0 0
    %1450 = vmatpush1.bf16.xpose.msra.mxu0 0
    %1451 = vmatprep.subr.bf16.mxu0 0
    %1452 = vmatpush1.bf16.xpose.msra.mxu0 0
    %1453 = vmatprep.subr.bf16.mxu0 0
    %1454 = vmatpush1.bf16.xpose.msra.mxu0 0
    %1455 = vmatprep.mubr.bf16.mxu0 0
    %1456 = vmatmul.mubr.bf16.gmra.mrb[0].mxu0 %v1418
    %v1457 = vpop.f32.mrb[0].mxu0
    %v1458 = vadd.f32 0.0, %v1457
    %v1459 = vpop.f32.mrb[0].mxu0
    %v1460 = vpop.f32.mrb[0].mxu0
    %v1461 = vpop.f32.mrb[0].mxu0
    %1462 = vdwg.mxu0
    %v1464 = vsel %vm956, %v871, 0
    %v1467 = vsel %vm956, %v911, 0
    %1469 = vmatprep.subr.bf16.mxu0 0
    %1470 = vmatpush1.bf16.xpose.msra.mxu0 %v1467
    %1471 = vmatprep.subr.bf16.mxu0 0
    %1472 = vmatpush1.bf16.xpose.msra.mxu0 0
    %1473 = vmatprep.subr.bf16.mxu0 0
    %1474 = vmatpush1.bf16.xpose.msra.mxu0 0
    %1475 = vmatprep.subr.bf16.mxu0 0
    %1476 = vmatpush1.bf16.xpose.msra.mxu0 0
    %1477 = vmatprep.subr.bf16.mxu0 0
    %1478 = vmatpush1.bf16.xpose.msra.mxu0 0
    %1479 = vmatprep.subr.bf16.mxu0 0
    %1480 = vmatpush1.bf16.xpose.msra.mxu0 0
    %1481 = vmatprep.subr.bf16.mxu0 0
    %1482 = vmatpush1.bf16.xpose.msra.mxu0 0
    %1483 = vmatprep.subr.bf16.mxu0 0
    %1484 = vmatpush1.bf16.xpose.msra.mxu0 0
    %1485 = vmatprep.subr.bf16.mxu0 0
    %1486 = vmatpush1.bf16.xpose.msra.mxu0 0
    %1487 = vmatprep.subr.bf16.mxu0 0
    %1488 = vmatpush1.bf16.xpose.msra.mxu0 0
    %1489 = vmatprep.subr.bf16.mxu0 0
    %1490 = vmatpush1.bf16.xpose.msra.mxu0 0
    %1491 = vmatprep.subr.bf16.mxu0 0
    %1492 = vmatpush1.bf16.xpose.msra.mxu0 0
    %1493 = vmatprep.subr.bf16.mxu0 0
    %1494 = vmatpush1.bf16.xpose.msra.mxu0 0
    %1495 = vmatprep.subr.bf16.mxu0 0
    %1496 = vmatpush1.bf16.xpose.msra.mxu0 0
    %1497 = vmatprep.subr.bf16.mxu0 0
    %1498 = vmatpush1.bf16.xpose.msra.mxu0 0
    %1499 = vmatprep.subr.bf16.mxu0 0
    %1500 = vmatpush1.bf16.xpose.msra.mxu0 0
    %1501 = vmatprep.mubr.bf16.mxu0 0
    %1502 = vmatmul.mubr.bf16.gmra.mrb[0].mxu0 %v1464
    %v1503 = vpop.f32.mrb[0].mxu0
    %v1504 = vadd.f32 0.0, %v1503
    %v1505 = vpop.f32.mrb[0].mxu0
    %v1506 = vpop.f32.mrb[0].mxu0
    %v1507 = vpop.f32.mrb[0].mxu0
    %1508 = vdwg.mxu0
    %v1510 = vsel %vm956, %v872, 0
    %v1513 = vsel %vm956, %v912, 0
    %1515 = vmatprep.subr.bf16.mxu0 0
    %1516 = vmatpush1.bf16.xpose.msra.mxu0 %v1513
    %1517 = vmatprep.subr.bf16.mxu0 0
    %1518 = vmatpush1.bf16.xpose.msra.mxu0 0
    %1519 = vmatprep.subr.bf16.mxu0 0
    %1520 = vmatpush1.bf16.xpose.msra.mxu0 0
    %1521 = vmatprep.subr.bf16.mxu0 0
    %1522 = vmatpush1.bf16.xpose.msra.mxu0 0
    %1523 = vmatprep.subr.bf16.mxu0 0
    %1524 = vmatpush1.bf16.xpose.msra.mxu0 0
    %1525 = vmatprep.subr.bf16.mxu0 0
    %1526 = vmatpush1.bf16.xpose.msra.mxu0 0
    %1527 = vmatprep.subr.bf16.mxu0 0
    %1528 = vmatpush1.bf16.xpose.msra.mxu0 0
    %1529 = vmatprep.subr.bf16.mxu0 0
    %1530 = vmatpush1.bf16.xpose.msra.mxu0 0
    %1531 = vmatprep.subr.bf16.mxu0 0
    %1532 = vmatpush1.bf16.xpose.msra.mxu0 0
    %1533 = vmatprep.subr.bf16.mxu0 0
    %1534 = vmatpush1.bf16.xpose.msra.mxu0 0
    %1535 = vmatprep.subr.bf16.mxu0 0
    %1536 = vmatpush1.bf16.xpose.msra.mxu0 0
    %1537 = vmatprep.subr.bf16.mxu0 0
    %1538 = vmatpush1.bf16.xpose.msra.mxu0 0
    %1539 = vmatprep.subr.bf16.mxu0 0
    %1540 = vmatpush1.bf16.xpose.msra.mxu0 0
    %1541 = vmatprep.subr.bf16.mxu0 0
    %1542 = vmatpush1.bf16.xpose.msra.mxu0 0
    %1543 = vmatprep.subr.bf16.mxu0 0
    %1544 = vmatpush1.bf16.xpose.msra.mxu0 0
    %1545 = vmatprep.subr.bf16.mxu0 0
    %1546 = vmatpush1.bf16.xpose.msra.mxu0 0
    %1547 = vmatprep.mubr.bf16.mxu0 0
    %1548 = vmatmul.mubr.bf16.gmra.mrb[0].mxu0 %v1510
    %v1549 = vpop.f32.mrb[0].mxu0
    %v1550 = vadd.f32 0.0, %v1549
    %v1551 = vpop.f32.mrb[0].mxu0
    %v1552 = vpop.f32.mrb[0].mxu0
    %v1553 = vpop.f32.mrb[0].mxu0
    %1554 = vdwg.mxu0
    %v1556 = vsel %vm956, %v873, 0
    %v1559 = vsel %vm956, %v913, 0
    %1561 = vmatprep.subr.bf16.mxu0 0
    %1562 = vmatpush1.bf16.xpose.msra.mxu0 %v1559
    %1563 = vmatprep.subr.bf16.mxu0 0
    %1564 = vmatpush1.bf16.xpose.msra.mxu0 0
    %1565 = vmatprep.subr.bf16.mxu0 0
    %1566 = vmatpush1.bf16.xpose.msra.mxu0 0
    %1567 = vmatprep.subr.bf16.mxu0 0
    %1568 = vmatpush1.bf16.xpose.msra.mxu0 0
    %1569 = vmatprep.subr.bf16.mxu0 0
    %1570 = vmatpush1.bf16.xpose.msra.mxu0 0
    %1571 = vmatprep.subr.bf16.mxu0 0
    %1572 = vmatpush1.bf16.xpose.msra.mxu0 0
    %1573 = vmatprep.subr.bf16.mxu0 0
    %1574 = vmatpush1.bf16.xpose.msra.mxu0 0
    %1575 = vmatprep.subr.bf16.mxu0 0
    %1576 = vmatpush1.bf16.xpose.msra.mxu0 0
    %1577 = vmatprep.subr.bf16.mxu0 0
    %1578 = vmatpush1.bf16.xpose.msra.mxu0 0
    %1579 = vmatprep.subr.bf16.mxu0 0
    %1580 = vmatpush1.bf16.xpose.msra.mxu0 0
    %1581 = vmatprep.subr.bf16.mxu0 0
    %1582 = vmatpush1.bf16.xpose.msra.mxu0 0
    %1583 = vmatprep.subr.bf16.mxu0 0
    %1584 = vmatpush1.bf16.xpose.msra.mxu0 0
    %1585 = vmatprep.subr.bf16.mxu0 0
    %1586 = vmatpush1.bf16.xpose.msra.mxu0 0
    %1587 = vmatprep.subr.bf16.mxu0 0
    %1588 = vmatpush1.bf16.xpose.msra.mxu0 0
    %1589 = vmatprep.subr.bf16.mxu0 0
    %1590 = vmatpush1.bf16.xpose.msra.mxu0 0
    %1591 = vmatprep.subr.bf16.mxu0 0
    %1592 = vmatpush1.bf16.xpose.msra.mxu0 0
    %1593 = vmatprep.mubr.bf16.mxu0 0
    %1594 = vmatmul.mubr.bf16.gmra.mrb[0].mxu0 %v1556
    %v1595 = vpop.f32.mrb[0].mxu0
    %v1596 = vadd.f32 0.0, %v1595
    %v1597 = vpop.f32.mrb[0].mxu0
    %v1598 = vpop.f32.mrb[0].mxu0
    %v1599 = vpop.f32.mrb[0].mxu0
    %1600 = vdwg.mxu0
    %v1602 = vsel %vm956, %v874, 0
    %v1605 = vsel %vm956, %v914, 0
    %1607 = vmatprep.subr.bf16.mxu0 0
    %1608 = vmatpush1.bf16.xpose.msra.mxu0 %v1605
    %1609 = vmatprep.subr.bf16.mxu0 0
    %1610 = vmatpush1.bf16.xpose.msra.mxu0 0
    %1611 = vmatprep.subr.bf16.mxu0 0
    %1612 = vmatpush1.bf16.xpose.msra.mxu0 0
    %1613 = vmatprep.subr.bf16.mxu0 0
    %1614 = vmatpush1.bf16.xpose.msra.mxu0 0
    %1615 = vmatprep.subr.bf16.mxu0 0
    %1616 = vmatpush1.bf16.xpose.msra.mxu0 0
    %1617 = vmatprep.subr.bf16.mxu0 0
    %1618 = vmatpush1.bf16.xpose.msra.mxu0 0
    %1619 = vmatprep.subr.bf16.mxu0 0
    %1620 = vmatpush1.bf16.xpose.msra.mxu0 0
    %1621 = vmatprep.subr.bf16.mxu0 0
    %1622 = vmatpush1.bf16.xpose.msra.mxu0 0
    %1623 = vmatprep.subr.bf16.mxu0 0
    %1624 = vmatpush1.bf16.xpose.msra.mxu0 0
    %1625 = vmatprep.subr.bf16.mxu0 0
    %1626 = vmatpush1.bf16.xpose.msra.mxu0 0
    %1627 = vmatprep.subr.bf16.mxu0 0
    %1628 = vmatpush1.bf16.xpose.msra.mxu0 0
    %1629 = vmatprep.subr.bf16.mxu0 0
    %1630 = vmatpush1.bf16.xpose.msra.mxu0 0
    %1631 = vmatprep.subr.bf16.mxu0 0
    %1632 = vmatpush1.bf16.xpose.msra.mxu0 0
    %1633 = vmatprep.subr.bf16.mxu0 0
    %1634 = vmatpush1.bf16.xpose.msra.mxu0 0
    %1635 = vmatprep.subr.bf16.mxu0 0
    %1636 = vmatpush1.bf16.xpose.msra.mxu0 0
    %1637 = vmatprep.subr.bf16.mxu0 0
    %1638 = vmatpush1.bf16.xpose.msra.mxu0 0
    %1639 = vmatprep.mubr.bf16.mxu0 0
    %1640 = vmatmul.mubr.bf16.gmra.mrb[0].mxu0 %v1602
    %v1641 = vpop.f32.mrb[0].mxu0
    %v1642 = vadd.f32 0.0, %v1641
    %v1643 = vpop.f32.mrb[0].mxu0
    %v1644 = vpop.f32.mrb[0].mxu0
    %v1645 = vpop.f32.mrb[0].mxu0
    %1646 = vdwg.mxu0
    %v1648 = vsel %vm956, %v875, 0
    %v1651 = vsel %vm956, %v915, 0
    %1653 = vmatprep.subr.bf16.mxu0 0
    %1654 = vmatpush1.bf16.xpose.msra.mxu0 %v1651
    %1655 = vmatprep.subr.bf16.mxu0 0
    %1656 = vmatpush1.bf16.xpose.msra.mxu0 0
    %1657 = vmatprep.subr.bf16.mxu0 0
    %1658 = vmatpush1.bf16.xpose.msra.mxu0 0
    %1659 = vmatprep.subr.bf16.mxu0 0
    %1660 = vmatpush1.bf16.xpose.msra.mxu0 0
    %1661 = vmatprep.subr.bf16.mxu0 0
    %1662 = vmatpush1.bf16.xpose.msra.mxu0 0
    %1663 = vmatprep.subr.bf16.mxu0 0
    %1664 = vmatpush1.bf16.xpose.msra.mxu0 0
    %1665 = vmatprep.subr.bf16.mxu0 0
    %1666 = vmatpush1.bf16.xpose.msra.mxu0 0
    %1667 = vmatprep.subr.bf16.mxu0 0
    %1668 = vmatpush1.bf16.xpose.msra.mxu0 0
    %1669 = vmatprep.subr.bf16.mxu0 0
    %1670 = vmatpush1.bf16.xpose.msra.mxu0 0
    %1671 = vmatprep.subr.bf16.mxu0 0
    %1672 = vmatpush1.bf16.xpose.msra.mxu0 0
    %1673 = vmatprep.subr.bf16.mxu0 0
    %1674 = vmatpush1.bf16.xpose.msra.mxu0 0
    %1675 = vmatprep.subr.bf16.mxu0 0
    %1676 = vmatpush1.bf16.xpose.msra.mxu0 0
    %1677 = vmatprep.subr.bf16.mxu0 0
    %1678 = vmatpush1.bf16.xpose.msra.mxu0 0
    %1679 = vmatprep.subr.bf16.mxu0 0
    %1680 = vmatpush1.bf16.xpose.msra.mxu0 0
    %1681 = vmatprep.subr.bf16.mxu0 0
    %1682 = vmatpush1.bf16.xpose.msra.mxu0 0
    %1683 = vmatprep.subr.bf16.mxu0 0
    %1684 = vmatpush1.bf16.xpose.msra.mxu0 0
    %1685 = vmatprep.mubr.bf16.mxu0 0
    %1686 = vmatmul.mubr.bf16.gmra.mrb[0].mxu0 %v1648
    %v1687 = vpop.f32.mrb[0].mxu0
    %v1688 = vadd.f32 0.0, %v1687
    %v1689 = vpop.f32.mrb[0].mxu0
    %v1690 = vpop.f32.mrb[0].mxu0
    %v1691 = vpop.f32.mrb[0].mxu0
    %1692 = vdwg.mxu0
    %vm1693 = vcmask 64512
    %v1694 = vsel %vm1693, %v998, -inf
    %1695 = vmax.xlane.f32.xlu0 %v1694
    %v1696 = vpop.xlane.xlu0 %1695
    %v1697 = vsel %vm1693, %v1044, -inf
    %1698 = vmax.xlane.f32.xlu0 %v1697
    %v1699 = vpop.xlane.xlu0 %1698
    %v1700 = vsel %vm1693, %v1090, -inf
    %1701 = vmax.xlane.f32.xlu0 %v1700
    %v1702 = vpop.xlane.xlu0 %1701
    %v1703 = vsel %vm1693, %v1136, -inf
    %1704 = vmax.xlane.f32.xlu0 %v1703
    %v1705 = vpop.xlane.xlu0 %1704
    %v1706 = vsel %vm1693, %v1182, -inf
    %1707 = vmax.xlane.f32.xlu0 %v1706
    %v1708 = vpop.xlane.xlu0 %1707
    %v1709 = vsel %vm1693, %v1228, -inf
    %1710 = vmax.xlane.f32.xlu0 %v1709
    %v1711 = vpop.xlane.xlu0 %1710
    %v1712 = vsel %vm1693, %v1274, -inf
    %1713 = vmax.xlane.f32.xlu0 %v1712
    %v1714 = vpop.xlane.xlu0 %1713
    %v1715 = vsel %vm1693, %v1320, -inf
    %1716 = vmax.xlane.f32.xlu0 %v1715
    %v1717 = vpop.xlane.xlu0 %1716
    %v1718 = vsel %vm1693, %v1366, -inf
    %1719 = vmax.xlane.f32.xlu0 %v1718
    %v1720 = vpop.xlane.xlu0 %1719
    %v1721 = vsel %vm1693, %v1412, -inf
    %1722 = vmax.xlane.f32.xlu0 %v1721
    %v1723 = vpop.xlane.xlu0 %1722
    %v1724 = vsel %vm1693, %v1458, -inf
    %1725 = vmax.xlane.f32.xlu0 %v1724
    %v1726 = vpop.xlane.xlu0 %1725
    %v1727 = vsel %vm1693, %v1504, -inf
    %1728 = vmax.xlane.f32.xlu0 %v1727
    %v1729 = vpop.xlane.xlu0 %1728
    %v1730 = vsel %vm1693, %v1550, -inf
    %1731 = vmax.xlane.f32.xlu0 %v1730
    %v1732 = vpop.xlane.xlu0 %1731
    %v1733 = vsel %vm1693, %v1596, -inf
    %1734 = vmax.xlane.f32.xlu0 %v1733
    %v1735 = vpop.xlane.xlu0 %1734
    %v1736 = vsel %vm1693, %v1642, -inf
    %1737 = vmax.xlane.f32.xlu0 %v1736
    %v1738 = vpop.xlane.xlu0 %1737
    %v1739 = vsel %vm1693, %v1688, -inf
    %1740 = vmax.xlane.f32.xlu0 %v1739
    %v1741 = vpop.xlane.xlu0 %1740
    %v1742 = vsub.f32 %v998, %v1696
    %v1743 = vsub.f32 %v1044, %v1699
    %v1744 = vsub.f32 %v1090, %v1702
    %v1745 = vsub.f32 %v1136, %v1705
    %v1746 = vsub.f32 %v1182, %v1708
    %v1747 = vsub.f32 %v1228, %v1711
    %v1748 = vsub.f32 %v1274, %v1714
    %v1749 = vsub.f32 %v1320, %v1717
    %v1750 = vsub.f32 %v1366, %v1720
    %v1751 = vsub.f32 %v1412, %v1723
    %v1752 = vsub.f32 %v1458, %v1726
    %v1753 = vsub.f32 %v1504, %v1729
    %v1754 = vsub.f32 %v1550, %v1732
    %v1755 = vsub.f32 %v1596, %v1735
    %v1756 = vsub.f32 %v1642, %v1738
    %v1757 = vsub.f32 %v1688, %v1741
    %v1758 = vmul.f32 %v1742, 1.442695
    %v1759 = vpow.pop %v1758
    %v1760 = vmul.f32 %v1743, 1.442695
    %v1761 = vpow.pop %v1760
    %v1762 = vmul.f32 %v1744, 1.442695
    %v1763 = vpow.pop %v1762
    %v1764 = vmul.f32 %v1745, 1.442695
    %v1765 = vpow.pop %v1764
    %v1766 = vmul.f32 %v1746, 1.442695
    %v1767 = vpow.pop %v1766
    %v1768 = vmul.f32 %v1747, 1.442695
    %v1769 = vpow.pop %v1768
    %v1770 = vmul.f32 %v1748, 1.442695
    %v1771 = vpow.pop %v1770
    %v1772 = vmul.f32 %v1749, 1.442695
    %v1773 = vpow.pop %v1772
    %v1774 = vmul.f32 %v1750, 1.442695
    %v1775 = vpow.pop %v1774
    %v1776 = vmul.f32 %v1751, 1.442695
    %v1777 = vpow.pop %v1776
    %v1778 = vmul.f32 %v1752, 1.442695
    %v1779 = vpow.pop %v1778
    %v1780 = vmul.f32 %v1753, 1.442695
    %v1781 = vpow.pop %v1780
    %v1782 = vmul.f32 %v1754, 1.442695
    %v1783 = vpow.pop %v1782
    %v1784 = vmul.f32 %v1755, 1.442695
    %v1785 = vpow.pop %v1784
    %v1786 = vmul.f32 %v1756, 1.442695
    %v1787 = vpow.pop %v1786
    %v1788 = vmul.f32 %v1757, 1.442695
    %v1789 = vpow.pop %v1788
    %v1790 = vsel %vm1693, %v1759, 0.0
    %1791 = vadd.xlane.f32.xlu0 %v1790
    %v1792 = vpop.xlane.xlu0 %1791
    %v1793 = vsel %vm1693, %v1761, 0.0
    %1794 = vadd.xlane.f32.xlu0 %v1793
    %v1795 = vpop.xlane.xlu0 %1794
    %v1796 = vsel %vm1693, %v1763, 0.0
    %1797 = vadd.xlane.f32.xlu0 %v1796
    %v1798 = vpop.xlane.xlu0 %1797
    %v1799 = vsel %vm1693, %v1765, 0.0
    %1800 = vadd.xlane.f32.xlu0 %v1799
    %v1801 = vpop.xlane.xlu0 %1800
    %v1802 = vsel %vm1693, %v1767, 0.0
    %1803 = vadd.xlane.f32.xlu0 %v1802
    %v1804 = vpop.xlane.xlu0 %1803
    %v1805 = vsel %vm1693, %v1769, 0.0
    %1806 = vadd.xlane.f32.xlu0 %v1805
    %v1807 = vpop.xlane.xlu0 %1806
    %v1808 = vsel %vm1693, %v1771, 0.0
    %1809 = vadd.xlane.f32.xlu0 %v1808
    %v1810 = vpop.xlane.xlu0 %1809
    %v1811 = vsel %vm1693, %v1773, 0.0
    %1812 = vadd.xlane.f32.xlu0 %v1811
    %v1813 = vpop.xlane.xlu0 %1812
    %v1814 = vsel %vm1693, %v1775, 0.0
    %1815 = vadd.xlane.f32.xlu0 %v1814
    %v1816 = vpop.xlane.xlu0 %1815
    %v1817 = vsel %vm1693, %v1777, 0.0
    %1818 = vadd.xlane.f32.xlu0 %v1817
    %v1819 = vpop.xlane.xlu0 %1818
    %v1820 = vsel %vm1693, %v1779, 0.0
    %1821 = vadd.xlane.f32.xlu0 %v1820
    %v1822 = vpop.xlane.xlu0 %1821
    %v1823 = vsel %vm1693, %v1781, 0.0
    %1824 = vadd.xlane.f32.xlu0 %v1823
    %v1825 = vpop.xlane.xlu0 %1824
    %v1826 = vsel %vm1693, %v1783, 0.0
    %1827 = vadd.xlane.f32.xlu0 %v1826
    %v1828 = vpop.xlane.xlu0 %1827
    %v1829 = vsel %vm1693, %v1785, 0.0
    %1830 = vadd.xlane.f32.xlu0 %v1829
    %v1831 = vpop.xlane.xlu0 %1830
    %v1832 = vsel %vm1693, %v1787, 0.0
    %1833 = vadd.xlane.f32.xlu0 %v1832
    %v1834 = vpop.xlane.xlu0 %1833
    %v1835 = vsel %vm1693, %v1789, 0.0
    %1836 = vadd.xlane.f32.xlu0 %v1835
    %v1837 = vpop.xlane.xlu0 %1836
    %v1838 = vrcp.pop %v1792
    %v1839 = vrcp.pop %v1795
    %v1840 = vrcp.pop %v1798
    %v1841 = vrcp.pop %v1801
    %v1842 = vrcp.pop %v1804
    %v1843 = vrcp.pop %v1807
    %v1844 = vrcp.pop %v1810
    %v1845 = vrcp.pop %v1813
    %v1846 = vrcp.pop %v1816
    %v1847 = vrcp.pop %v1819
    %v1848 = vrcp.pop %v1822
    %v1849 = vrcp.pop %v1825
    %v1850 = vrcp.pop %v1828
    %v1851 = vrcp.pop %v1831
    %v1852 = vrcp.pop %v1834
    %v1853 = vrcp.pop %v1837
    %v1854 = vmul.f32 %v1759, %v1838
    %v1855 = vmul.f32 %v1761, %v1839
    %v1856 = vmul.f32 %v1763, %v1840
    %v1857 = vmul.f32 %v1765, %v1841
    %v1858 = vmul.f32 %v1767, %v1842
    %v1859 = vmul.f32 %v1769, %v1843
    %v1860 = vmul.f32 %v1771, %v1844
    %v1861 = vmul.f32 %v1773, %v1845
    %v1862 = vmul.f32 %v1775, %v1846
    %v1863 = vmul.f32 %v1777, %v1847
    %v1864 = vmul.f32 %v1779, %v1848
    %v1865 = vmul.f32 %v1781, %v1849
    %v1866 = vmul.f32 %v1783, %v1850
    %v1867 = vmul.f32 %v1785, %v1851
    %v1868 = vmul.f32 %v1787, %v1852
    %v1869 = vmul.f32 %v1789, %v1853
    %v1870 = vpack.c.bf16 %v1854, %v1854
    %v1871 = vpack.c.bf16 %v1855, %v1855
    %v1872 = vpack.c.bf16 %v1856, %v1856
    %v1873 = vpack.c.bf16 %v1857, %v1857
    %v1874 = vpack.c.bf16 %v1858, %v1858
    %v1875 = vpack.c.bf16 %v1859, %v1859
    %v1876 = vpack.c.bf16 %v1860, %v1860
    %v1877 = vpack.c.bf16 %v1861, %v1861
    %v1878 = vpack.c.bf16 %v1862, %v1862
    %v1879 = vpack.c.bf16 %v1863, %v1863
    %v1880 = vpack.c.bf16 %v1864, %v1864
    %v1881 = vpack.c.bf16 %v1865, %v1865
    %v1882 = vpack.c.bf16 %v1866, %v1866
    %v1883 = vpack.c.bf16 %v1867, %v1867
    %v1884 = vpack.c.bf16 %v1868, %v1868
    %v1885 = vpack.c.bf16 %v1869, %v1869
    %v1887 = vsel %vm1693, %v1870, 0
    %vm1889 = vcmask 1043456
    %v1891 = vsel %vm1889, %v940, 0
    %1893 = vmatprep.subr.bf16.mxu0 0
    %1894 = vmatpush1.bf16.msra.mxu0 %v1891
    %1895 = vmatprep.subr.bf16.mxu0 0
    %1896 = vmatpush1.bf16.msra.mxu0 0
    %1897 = vmatprep.subr.bf16.mxu0 0
    %1898 = vmatpush1.bf16.msra.mxu0 0
    %1899 = vmatprep.subr.bf16.mxu0 0
    %1900 = vmatpush1.bf16.msra.mxu0 0
    %1901 = vmatprep.subr.bf16.mxu0 0
    %1902 = vmatpush1.bf16.msra.mxu0 0
    %1903 = vmatprep.subr.bf16.mxu0 0
    %1904 = vmatpush1.bf16.msra.mxu0 0
    %1905 = vmatprep.subr.bf16.mxu0 0
    %1906 = vmatpush1.bf16.msra.mxu0 0
    %1907 = vmatprep.subr.bf16.mxu0 0
    %1908 = vmatpush1.bf16.msra.mxu0 0
    %1909 = vmatprep.subr.bf16.mxu0 0
    %1910 = vmatpush1.bf16.msra.mxu0 0
    %1911 = vmatprep.subr.bf16.mxu0 0
    %1912 = vmatpush1.bf16.msra.mxu0 0
    %1913 = vmatprep.subr.bf16.mxu0 0
    %1914 = vmatpush1.bf16.msra.mxu0 0
    %1915 = vmatprep.subr.bf16.mxu0 0
    %1916 = vmatpush1.bf16.msra.mxu0 0
    %1917 = vmatprep.subr.bf16.mxu0 0
    %1918 = vmatpush1.bf16.msra.mxu0 0
    %1919 = vmatprep.subr.bf16.mxu0 0
    %1920 = vmatpush1.bf16.msra.mxu0 0
    %1921 = vmatprep.subr.bf16.mxu0 0
    %1922 = vmatpush1.bf16.msra.mxu0 0
    %1923 = vmatprep.subr.bf16.mxu0 0
    %1924 = vmatpush1.bf16.msra.mxu0 0
    %1925 = vmatprep.mubr.bf16.mxu0 0
    %1926 = vmatmul.mubr.bf16.gmra.mrb[0].mxu0 %v1887
    %v1927 = vpop.f32.mrb[0].mxu0
    %v1928 = vadd.f32 0.0, %v1927
    %v1929 = vpop.f32.mrb[0].mxu0
    %v1930 = vpop.f32.mrb[0].mxu0
    %v1931 = vpop.f32.mrb[0].mxu0
    %1932 = vdwg.mxu0
    %v1934 = vsel %vm1693, %v1871, 0
    %v1937 = vsel %vm1889, %v941, 0
    %1939 = vmatprep.subr.bf16.mxu0 0
    %1940 = vmatpush1.bf16.msra.mxu0 %v1937
    %1941 = vmatprep.subr.bf16.mxu0 0
    %1942 = vmatpush1.bf16.msra.mxu0 0
    %1943 = vmatprep.subr.bf16.mxu0 0
    %1944 = vmatpush1.bf16.msra.mxu0 0
    %1945 = vmatprep.subr.bf16.mxu0 0
    %1946 = vmatpush1.bf16.msra.mxu0 0
    %1947 = vmatprep.subr.bf16.mxu0 0
    %1948 = vmatpush1.bf16.msra.mxu0 0
    %1949 = vmatprep.subr.bf16.mxu0 0
    %1950 = vmatpush1.bf16.msra.mxu0 0
    %1951 = vmatprep.subr.bf16.mxu0 0
    %1952 = vmatpush1.bf16.msra.mxu0 0
    %1953 = vmatprep.subr.bf16.mxu0 0
    %1954 = vmatpush1.bf16.msra.mxu0 0
    %1955 = vmatprep.subr.bf16.mxu0 0
    %1956 = vmatpush1.bf16.msra.mxu0 0
    %1957 = vmatprep.subr.bf16.mxu0 0
    %1958 = vmatpush1.bf16.msra.mxu0 0
    %1959 = vmatprep.subr.bf16.mxu0 0
    %1960 = vmatpush1.bf16.msra.mxu0 0
    %1961 = vmatprep.subr.bf16.mxu0 0
    %1962 = vmatpush1.bf16.msra.mxu0 0
    %1963 = vmatprep.subr.bf16.mxu0 0
    %1964 = vmatpush1.bf16.msra.mxu0 0
    %1965 = vmatprep.subr.bf16.mxu0 0
    %1966 = vmatpush1.bf16.msra.mxu0 0
    %1967 = vmatprep.subr.bf16.mxu0 0
    %1968 = vmatpush1.bf16.msra.mxu0 0
    %1969 = vmatprep.subr.bf16.mxu0 0
    %1970 = vmatpush1.bf16.msra.mxu0 0
    %1971 = vmatprep.mubr.bf16.mxu0 0
    %1972 = vmatmul.mubr.bf16.gmra.mrb[0].mxu0 %v1934
    %v1973 = vpop.f32.mrb[0].mxu0
    %v1974 = vadd.f32 0.0, %v1973
    %v1975 = vpop.f32.mrb[0].mxu0
    %v1976 = vpop.f32.mrb[0].mxu0
    %v1977 = vpop.f32.mrb[0].mxu0
    %1978 = vdwg.mxu0
    %v1980 = vsel %vm1693, %v1872, 0
    %v1983 = vsel %vm1889, %v942, 0
    %1985 = vmatprep.subr.bf16.mxu0 0
    %1986 = vmatpush1.bf16.msra.mxu0 %v1983
    %1987 = vmatprep.subr.bf16.mxu0 0
    %1988 = vmatpush1.bf16.msra.mxu0 0
    %1989 = vmatprep.subr.bf16.mxu0 0
    %1990 = vmatpush1.bf16.msra.mxu0 0
    %1991 = vmatprep.subr.bf16.mxu0 0
    %1992 = vmatpush1.bf16.msra.mxu0 0
    %1993 = vmatprep.subr.bf16.mxu0 0
    %1994 = vmatpush1.bf16.msra.mxu0 0
    %1995 = vmatprep.subr.bf16.mxu0 0
    %1996 = vmatpush1.bf16.msra.mxu0 0
    %1997 = vmatprep.subr.bf16.mxu0 0
    %1998 = vmatpush1.bf16.msra.mxu0 0
    %1999 = vmatprep.subr.bf16.mxu0 0
    %2000 = vmatpush1.bf16.msra.mxu0 0
    %2001 = vmatprep.subr.bf16.mxu0 0
    %2002 = vmatpush1.bf16.msra.mxu0 0
    %2003 = vmatprep.subr.bf16.mxu0 0
    %2004 = vmatpush1.bf16.msra.mxu0 0
    %2005 = vmatprep.subr.bf16.mxu0 0
    %2006 = vmatpush1.bf16.msra.mxu0 0
    %2007 = vmatprep.subr.bf16.mxu0 0
    %2008 = vmatpush1.bf16.msra.mxu0 0
    %2009 = vmatprep.subr.bf16.mxu0 0
    %2010 = vmatpush1.bf16.msra.mxu0 0
    %2011 = vmatprep.subr.bf16.mxu0 0
    %2012 = vmatpush1.bf16.msra.mxu0 0
    %2013 = vmatprep.subr.bf16.mxu0 0
    %2014 = vmatpush1.bf16.msra.mxu0 0
    %2015 = vmatprep.subr.bf16.mxu0 0
    %2016 = vmatpush1.bf16.msra.mxu0 0
    %2017 = vmatprep.mubr.bf16.mxu0 0
    %2018 = vmatmul.mubr.bf16.gmra.mrb[0].mxu0 %v1980
    %v2019 = vpop.f32.mrb[0].mxu0
    %v2020 = vadd.f32 0.0, %v2019
    %v2021 = vpop.f32.mrb[0].mxu0
    %v2022 = vpop.f32.mrb[0].mxu0
    %v2023 = vpop.f32.mrb[0].mxu0
    %2024 = vdwg.mxu0
    %v2026 = vsel %vm1693, %v1873, 0
    %v2029 = vsel %vm1889, %v943, 0
    %2031 = vmatprep.subr.bf16.mxu0 0
    %2032 = vmatpush1.bf16.msra.mxu0 %v2029
    %2033 = vmatprep.subr.bf16.mxu0 0
    %2034 = vmatpush1.bf16.msra.mxu0 0
    %2035 = vmatprep.subr.bf16.mxu0 0
    %2036 = vmatpush1.bf16.msra.mxu0 0
    %2037 = vmatprep.subr.bf16.mxu0 0
    %2038 = vmatpush1.bf16.msra.mxu0 0
    %2039 = vmatprep.subr.bf16.mxu0 0
    %2040 = vmatpush1.bf16.msra.mxu0 0
    %2041 = vmatprep.subr.bf16.mxu0 0
    %2042 = vmatpush1.bf16.msra.mxu0 0
    %2043 = vmatprep.subr.bf16.mxu0 0
    %2044 = vmatpush1.bf16.msra.mxu0 0
    %2045 = vmatprep.subr.bf16.mxu0 0
    %2046 = vmatpush1.bf16.msra.mxu0 0
    %2047 = vmatprep.subr.bf16.mxu0 0
    %2048 = vmatpush1.bf16.msra.mxu0 0
    %2049 = vmatprep.subr.bf16.mxu0 0
    %2050 = vmatpush1.bf16.msra.mxu0 0
    %2051 = vmatprep.subr.bf16.mxu0 0
    %2052 = vmatpush1.bf16.msra.mxu0 0
    %2053 = vmatprep.subr.bf16.mxu0 0
    %2054 = vmatpush1.bf16.msra.mxu0 0
    %2055 = vmatprep.subr.bf16.mxu0 0
    %2056 = vmatpush1.bf16.msra.mxu0 0
    %2057 = vmatprep.subr.bf16.mxu0 0
    %2058 = vmatpush1.bf16.msra.mxu0 0
    %2059 = vmatprep.subr.bf16.mxu0 0
    %2060 = vmatpush1.bf16.msra.mxu0 0
    %2061 = vmatprep.subr.bf16.mxu0 0
    %2062 = vmatpush1.bf16.msra.mxu0 0
    %2063 = vmatprep.mubr.bf16.mxu0 0
    %2064 = vmatmul.mubr.bf16.gmra.mrb[0].mxu0 %v2026
    %v2065 = vpop.f32.mrb[0].mxu0
    %v2066 = vadd.f32 0.0, %v2065
    %v2067 = vpop.f32.mrb[0].mxu0
    %v2068 = vpop.f32.mrb[0].mxu0
    %v2069 = vpop.f32.mrb[0].mxu0
    %2070 = vdwg.mxu0
    %v2072 = vsel %vm1693, %v1874, 0
    %v2075 = vsel %vm1889, %v944, 0
    %2077 = vmatprep.subr.bf16.mxu0 0
    %2078 = vmatpush1.bf16.msra.mxu0 %v2075
    %2079 = vmatprep.subr.bf16.mxu0 0
    %2080 = vmatpush1.bf16.msra.mxu0 0
    %2081 = vmatprep.subr.bf16.mxu0 0
    %2082 = vmatpush1.bf16.msra.mxu0 0
    %2083 = vmatprep.subr.bf16.mxu0 0
    %2084 = vmatpush1.bf16.msra.mxu0 0
    %2085 = vmatprep.subr.bf16.mxu0 0
    %2086 = vmatpush1.bf16.msra.mxu0 0
    %2087 = vmatprep.subr.bf16.mxu0 0
    %2088 = vmatpush1.bf16.msra.mxu0 0
    %2089 = vmatprep.subr.bf16.mxu0 0
    %2090 = vmatpush1.bf16.msra.mxu0 0
    %2091 = vmatprep.subr.bf16.mxu0 0
    %2092 = vmatpush1.bf16.msra.mxu0 0
    %2093 = vmatprep.subr.bf16.mxu0 0
    %2094 = vmatpush1.bf16.msra.mxu0 0
    %2095 = vmatprep.subr.bf16.mxu0 0
    %2096 = vmatpush1.bf16.msra.mxu0 0
    %2097 = vmatprep.subr.bf16.mxu0 0
    %2098 = vmatpush1.bf16.msra.mxu0 0
    %2099 = vmatprep.subr.bf16.mxu0 0
    %2100 = vmatpush1.bf16.msra.mxu0 0
    %2101 = vmatprep.subr.bf16.mxu0 0
    %2102 = vmatpush1.bf16.msra.mxu0 0
    %2103 = vmatprep.subr.bf16.mxu0 0
    %2104 = vmatpush1.bf16.msra.mxu0 0
    %2105 = vmatprep.subr.bf16.mxu0 0
    %2106 = vmatpush1.bf16.msra.mxu0 0
    %2107 = vmatprep.subr.bf16.mxu0 0
    %2108 = vmatpush1.bf16.msra.mxu0 0
    %2109 = vmatprep.mubr.bf16.mxu0 0
    %2110 = vmatmul.mubr.bf16.gmra.mrb[0].mxu0 %v2072
    %v2111 = vpop.f32.mrb[0].mxu0
    %v2112 = vadd.f32 0.0, %v2111
    %v2113 = vpop.f32.mrb[0].mxu0
    %v2114 = vpop.f32.mrb[0].mxu0
    %v2115 = vpop.f32.mrb[0].mxu0
    %2116 = vdwg.mxu0
    %v2118 = vsel %vm1693, %v1875, 0
    %v2121 = vsel %vm1889, %v945, 0
    %2123 = vmatprep.subr.bf16.mxu0 0
    %2124 = vmatpush1.bf16.msra.mxu0 %v2121
    %2125 = vmatprep.subr.bf16.mxu0 0
    %2126 = vmatpush1.bf16.msra.mxu0 0
    %2127 = vmatprep.subr.bf16.mxu0 0
    %2128 = vmatpush1.bf16.msra.mxu0 0
    %2129 = vmatprep.subr.bf16.mxu0 0
    %2130 = vmatpush1.bf16.msra.mxu0 0
    %2131 = vmatprep.subr.bf16.mxu0 0
    %2132 = vmatpush1.bf16.msra.mxu0 0
    %2133 = vmatprep.subr.bf16.mxu0 0
    %2134 = vmatpush1.bf16.msra.mxu0 0
    %2135 = vmatprep.subr.bf16.mxu0 0
    %2136 = vmatpush1.bf16.msra.mxu0 0
    %2137 = vmatprep.subr.bf16.mxu0 0
    %2138 = vmatpush1.bf16.msra.mxu0 0
    %2139 = vmatprep.subr.bf16.mxu0 0
    %2140 = vmatpush1.bf16.msra.mxu0 0
    %2141 = vmatprep.subr.bf16.mxu0 0
    %2142 = vmatpush1.bf16.msra.mxu0 0
    %2143 = vmatprep.subr.bf16.mxu0 0
    %2144 = vmatpush1.bf16.msra.mxu0 0
    %2145 = vmatprep.subr.bf16.mxu0 0
    %2146 = vmatpush1.bf16.msra.mxu0 0
    %2147 = vmatprep.subr.bf16.mxu0 0
    %2148 = vmatpush1.bf16.msra.mxu0 0
    %2149 = vmatprep.subr.bf16.mxu0 0
    %2150 = vmatpush1.bf16.msra.mxu0 0
    %2151 = vmatprep.subr.bf16.mxu0 0
    %2152 = vmatpush1.bf16.msra.mxu0 0
    %2153 = vmatprep.subr.bf16.mxu0 0
    %2154 = vmatpush1.bf16.msra.mxu0 0
    %2155 = vmatprep.mubr.bf16.mxu0 0
    %2156 = vmatmul.mubr.bf16.gmra.mrb[0].mxu0 %v2118
    %v2157 = vpop.f32.mrb[0].mxu0
    %v2158 = vadd.f32 0.0, %v2157
    %v2159 = vpop.f32.mrb[0].mxu0
    %v2160 = vpop.f32.mrb[0].mxu0
    %v2161 = vpop.f32.mrb[0].mxu0
    %2162 = vdwg.mxu0
    %v2164 = vsel %vm1693, %v1876, 0
    %v2167 = vsel %vm1889, %v946, 0
    %2169 = vmatprep.subr.bf16.mxu0 0
    %2170 = vmatpush1.bf16.msra.mxu0 %v2167
    %2171 = vmatprep.subr.bf16.mxu0 0
    %2172 = vmatpush1.bf16.msra.mxu0 0
    %2173 = vmatprep.subr.bf16.mxu0 0
    %2174 = vmatpush1.bf16.msra.mxu0 0
    %2175 = vmatprep.subr.bf16.mxu0 0
    %2176 = vmatpush1.bf16.msra.mxu0 0
    %2177 = vmatprep.subr.bf16.mxu0 0
    %2178 = vmatpush1.bf16.msra.mxu0 0
    %2179 = vmatprep.subr.bf16.mxu0 0
    %2180 = vmatpush1.bf16.msra.mxu0 0
    %2181 = vmatprep.subr.bf16.mxu0 0
    %2182 = vmatpush1.bf16.msra.mxu0 0
    %2183 = vmatprep.subr.bf16.mxu0 0
    %2184 = vmatpush1.bf16.msra.mxu0 0
    %2185 = vmatprep.subr.bf16.mxu0 0
    %2186 = vmatpush1.bf16.msra.mxu0 0
    %2187 = vmatprep.subr.bf16.mxu0 0
    %2188 = vmatpush1.bf16.msra.mxu0 0
    %2189 = vmatprep.subr.bf16.mxu0 0
    %2190 = vmatpush1.bf16.msra.mxu0 0
    %2191 = vmatprep.subr.bf16.mxu0 0
    %2192 = vmatpush1.bf16.msra.mxu0 0
    %2193 = vmatprep.subr.bf16.mxu0 0
    %2194 = vmatpush1.bf16.msra.mxu0 0
    %2195 = vmatprep.subr.bf16.mxu0 0
    %2196 = vmatpush1.bf16.msra.mxu0 0
    %2197 = vmatprep.subr.bf16.mxu0 0
    %2198 = vmatpush1.bf16.msra.mxu0 0
    %2199 = vmatprep.subr.bf16.mxu0 0
    %2200 = vmatpush1.bf16.msra.mxu0 0
    %2201 = vmatprep.mubr.bf16.mxu0 0
    %2202 = vmatmul.mubr.bf16.gmra.mrb[0].mxu0 %v2164
    %v2203 = vpop.f32.mrb[0].mxu0
    %v2204 = vadd.f32 0.0, %v2203
    %v2205 = vpop.f32.mrb[0].mxu0
    %v2206 = vpop.f32.mrb[0].mxu0
    %v2207 = vpop.f32.mrb[0].mxu0
    %2208 = vdwg.mxu0
    %v2210 = vsel %vm1693, %v1877, 0
    %v2213 = vsel %vm1889, %v947, 0
    %2215 = vmatprep.subr.bf16.mxu0 0
    %2216 = vmatpush1.bf16.msra.mxu0 %v2213
    %2217 = vmatprep.subr.bf16.mxu0 0
    %2218 = vmatpush1.bf16.msra.mxu0 0
    %2219 = vmatprep.subr.bf16.mxu0 0
    %2220 = vmatpush1.bf16.msra.mxu0 0
    %2221 = vmatprep.subr.bf16.mxu0 0
    %2222 = vmatpush1.bf16.msra.mxu0 0
    %2223 = vmatprep.subr.bf16.mxu0 0
    %2224 = vmatpush1.bf16.msra.mxu0 0
    %2225 = vmatprep.subr.bf16.mxu0 0
    %2226 = vmatpush1.bf16.msra.mxu0 0
    %2227 = vmatprep.subr.bf16.mxu0 0
    %2228 = vmatpush1.bf16.msra.mxu0 0
    %2229 = vmatprep.subr.bf16.mxu0 0
    %2230 = vmatpush1.bf16.msra.mxu0 0
    %2231 = vmatprep.subr.bf16.mxu0 0
    %2232 = vmatpush1.bf16.msra.mxu0 0
    %2233 = vmatprep.subr.bf16.mxu0 0
    %2234 = vmatpush1.bf16.msra.mxu0 0
    %2235 = vmatprep.subr.bf16.mxu0 0
    %2236 = vmatpush1.bf16.msra.mxu0 0
    %2237 = vmatprep.subr.bf16.mxu0 0
    %2238 = vmatpush1.bf16.msra.mxu0 0
    %2239 = vmatprep.subr.bf16.mxu0 0
    %2240 = vmatpush1.bf16.msra.mxu0 0
    %2241 = vmatprep.subr.bf16.mxu0 0
    %2242 = vmatpush1.bf16.msra.mxu0 0
    %2243 = vmatprep.subr.bf16.mxu0 0
    %2244 = vmatpush1.bf16.msra.mxu0 0
    %2245 = vmatprep.subr.bf16.mxu0 0
    %2246 = vmatpush1.bf16.msra.mxu0 0
    %2247 = vmatprep.mubr.bf16.mxu0 0
    %2248 = vmatmul.mubr.bf16.gmra.mrb[0].mxu0 %v2210
    %v2249 = vpop.f32.mrb[0].mxu0
    %v2250 = vadd.f32 0.0, %v2249
    %v2251 = vpop.f32.mrb[0].mxu0
    %v2252 = vpop.f32.mrb[0].mxu0
    %v2253 = vpop.f32.mrb[0].mxu0
    %2254 = vdwg.mxu0
    %v2256 = vsel %vm1693, %v1878, 0
    %v2259 = vsel %vm1889, %v948, 0
    %2261 = vmatprep.subr.bf16.mxu0 0
    %2262 = vmatpush1.bf16.msra.mxu0 %v2259
    %2263 = vmatprep.subr.bf16.mxu0 0
    %2264 = vmatpush1.bf16.msra.mxu0 0
    %2265 = vmatprep.subr.bf16.mxu0 0
    %2266 = vmatpush1.bf16.msra.mxu0 0
    %2267 = vmatprep.subr.bf16.mxu0 0
    %2268 = vmatpush1.bf16.msra.mxu0 0
    %2269 = vmatprep.subr.bf16.mxu0 0
    %2270 = vmatpush1.bf16.msra.mxu0 0
    %2271 = vmatprep.subr.bf16.mxu0 0
    %2272 = vmatpush1.bf16.msra.mxu0 0
    %2273 = vmatprep.subr.bf16.mxu0 0
    %2274 = vmatpush1.bf16.msra.mxu0 0
    %2275 = vmatprep.subr.bf16.mxu0 0
    %2276 = vmatpush1.bf16.msra.mxu0 0
    %2277 = vmatprep.subr.bf16.mxu0 0
    %2278 = vmatpush1.bf16.msra.mxu0 0
    %2279 = vmatprep.subr.bf16.mxu0 0
    %2280 = vmatpush1.bf16.msra.mxu0 0
    %2281 = vmatprep.subr.bf16.mxu0 0
    %2282 = vmatpush1.bf16.msra.mxu0 0
    %2283 = vmatprep.subr.bf16.mxu0 0
    %2284 = vmatpush1.bf16.msra.mxu0 0
    %2285 = vmatprep.subr.bf16.mxu0 0
    %2286 = vmatpush1.bf16.msra.mxu0 0
    %2287 = vmatprep.subr.bf16.mxu0 0
    %2288 = vmatpush1.bf16.msra.mxu0 0
    %2289 = vmatprep.subr.bf16.mxu0 0
    %2290 = vmatpush1.bf16.msra.mxu0 0
    %2291 = vmatprep.subr.bf16.mxu0 0
    %2292 = vmatpush1.bf16.msra.mxu0 0
    %2293 = vmatprep.mubr.bf16.mxu0 0
    %2294 = vmatmul.mubr.bf16.gmra.mrb[0].mxu0 %v2256
    %v2295 = vpop.f32.mrb[0].mxu0
    %v2296 = vadd.f32 0.0, %v2295
    %v2297 = vpop.f32.mrb[0].mxu0
    %v2298 = vpop.f32.mrb[0].mxu0
    %v2299 = vpop.f32.mrb[0].mxu0
    %2300 = vdwg.mxu0
    %v2302 = vsel %vm1693, %v1879, 0
    %v2305 = vsel %vm1889, %v949, 0
    %2307 = vmatprep.subr.bf16.mxu0 0
    %2308 = vmatpush1.bf16.msra.mxu0 %v2305
    %2309 = vmatprep.subr.bf16.mxu0 0
    %2310 = vmatpush1.bf16.msra.mxu0 0
    %2311 = vmatprep.subr.bf16.mxu0 0
    %2312 = vmatpush1.bf16.msra.mxu0 0
    %2313 = vmatprep.subr.bf16.mxu0 0
    %2314 = vmatpush1.bf16.msra.mxu0 0
    %2315 = vmatprep.subr.bf16.mxu0 0
    %2316 = vmatpush1.bf16.msra.mxu0 0
    %2317 = vmatprep.subr.bf16.mxu0 0
    %2318 = vmatpush1.bf16.msra.mxu0 0
    %2319 = vmatprep.subr.bf16.mxu0 0
    %2320 = vmatpush1.bf16.msra.mxu0 0
    %2321 = vmatprep.subr.bf16.mxu0 0
    %2322 = vmatpush1.bf16.msra.mxu0 0
    %2323 = vmatprep.subr.bf16.mxu0 0
    %2324 = vmatpush1.bf16.msra.mxu0 0
    %2325 = vmatprep.subr.bf16.mxu0 0
    %2326 = vmatpush1.bf16.msra.mxu0 0
    %2327 = vmatprep.subr.bf16.mxu0 0
    %2328 = vmatpush1.bf16.msra.mxu0 0
    %2329 = vmatprep.subr.bf16.mxu0 0
    %2330 = vmatpush1.bf16.msra.mxu0 0
    %2331 = vmatprep.subr.bf16.mxu0 0
    %2332 = vmatpush1.bf16.msra.mxu0 0
    %2333 = vmatprep.subr.bf16.mxu0 0
    %2334 = vmatpush1.bf16.msra.mxu0 0
    %2335 = vmatprep.subr.bf16.mxu0 0
    %2336 = vmatpush1.bf16.msra.mxu0 0
    %2337 = vmatprep.subr.bf16.mxu0 0
    %2338 = vmatpush1.bf16.msra.mxu0 0
    %2339 = vmatprep.mubr.bf16.mxu0 0
    %2340 = vmatmul.mubr.bf16.gmra.mrb[0].mxu0 %v2302
    %v2341 = vpop.f32.mrb[0].mxu0
    %v2342 = vadd.f32 0.0, %v2341
    %v2343 = vpop.f32.mrb[0].mxu0
    %v2344 = vpop.f32.mrb[0].mxu0
    %v2345 = vpop.f32.mrb[0].mxu0
    %2346 = vdwg.mxu0
    %v2348 = vsel %vm1693, %v1880, 0
    %v2351 = vsel %vm1889, %v950, 0
    %2353 = vmatprep.subr.bf16.mxu0 0
    %2354 = vmatpush1.bf16.msra.mxu0 %v2351
    %2355 = vmatprep.subr.bf16.mxu0 0
    %2356 = vmatpush1.bf16.msra.mxu0 0
    %2357 = vmatprep.subr.bf16.mxu0 0
    %2358 = vmatpush1.bf16.msra.mxu0 0
    %2359 = vmatprep.subr.bf16.mxu0 0
    %2360 = vmatpush1.bf16.msra.mxu0 0
    %2361 = vmatprep.subr.bf16.mxu0 0
    %2362 = vmatpush1.bf16.msra.mxu0 0
    %2363 = vmatprep.subr.bf16.mxu0 0
    %2364 = vmatpush1.bf16.msra.mxu0 0
    %2365 = vmatprep.subr.bf16.mxu0 0
    %2366 = vmatpush1.bf16.msra.mxu0 0
    %2367 = vmatprep.subr.bf16.mxu0 0
    %2368 = vmatpush1.bf16.msra.mxu0 0
    %2369 = vmatprep.subr.bf16.mxu0 0
    %2370 = vmatpush1.bf16.msra.mxu0 0
    %2371 = vmatprep.subr.bf16.mxu0 0
    %2372 = vmatpush1.bf16.msra.mxu0 0
    %2373 = vmatprep.subr.bf16.mxu0 0
    %2374 = vmatpush1.bf16.msra.mxu0 0
    %2375 = vmatprep.subr.bf16.mxu0 0
    %2376 = vmatpush1.bf16.msra.mxu0 0
    %2377 = vmatprep.subr.bf16.mxu0 0
    %2378 = vmatpush1.bf16.msra.mxu0 0
    %2379 = vmatprep.subr.bf16.mxu0 0
    %2380 = vmatpush1.bf16.msra.mxu0 0
    %2381 = vmatprep.subr.bf16.mxu0 0
    %2382 = vmatpush1.bf16.msra.mxu0 0
    %2383 = vmatprep.subr.bf16.mxu0 0
    %2384 = vmatpush1.bf16.msra.mxu0 0
    %2385 = vmatprep.mubr.bf16.mxu0 0
    %2386 = vmatmul.mubr.bf16.gmra.mrb[0].mxu0 %v2348
    %v2387 = vpop.f32.mrb[0].mxu0
    %v2388 = vadd.f32 0.0, %v2387
    %v2389 = vpop.f32.mrb[0].mxu0
    %v2390 = vpop.f32.mrb[0].mxu0
    %v2391 = vpop.f32.mrb[0].mxu0
    %2392 = vdwg.mxu0
    %v2394 = vsel %vm1693, %v1881, 0
    %v2397 = vsel %vm1889, %v951, 0
    %2399 = vmatprep.subr.bf16.mxu0 0
    %2400 = vmatpush1.bf16.msra.mxu0 %v2397
    %2401 = vmatprep.subr.bf16.mxu0 0
    %2402 = vmatpush1.bf16.msra.mxu0 0
    %2403 = vmatprep.subr.bf16.mxu0 0
    %2404 = vmatpush1.bf16.msra.mxu0 0
    %2405 = vmatprep.subr.bf16.mxu0 0
    %2406 = vmatpush1.bf16.msra.mxu0 0
    %2407 = vmatprep.subr.bf16.mxu0 0
    %2408 = vmatpush1.bf16.msra.mxu0 0
    %2409 = vmatprep.subr.bf16.mxu0 0
    %2410 = vmatpush1.bf16.msra.mxu0 0
    %2411 = vmatprep.subr.bf16.mxu0 0
    %2412 = vmatpush1.bf16.msra.mxu0 0
    %2413 = vmatprep.subr.bf16.mxu0 0
    %2414 = vmatpush1.bf16.msra.mxu0 0
    %2415 = vmatprep.subr.bf16.mxu0 0
    %2416 = vmatpush1.bf16.msra.mxu0 0
    %2417 = vmatprep.subr.bf16.mxu0 0
    %2418 = vmatpush1.bf16.msra.mxu0 0
    %2419 = vmatprep.subr.bf16.mxu0 0
    %2420 = vmatpush1.bf16.msra.mxu0 0
    %2421 = vmatprep.subr.bf16.mxu0 0
    %2422 = vmatpush1.bf16.msra.mxu0 0
    %2423 = vmatprep.subr.bf16.mxu0 0
    %2424 = vmatpush1.bf16.msra.mxu0 0
    %2425 = vmatprep.subr.bf16.mxu0 0
    %2426 = vmatpush1.bf16.msra.mxu0 0
    %2427 = vmatprep.subr.bf16.mxu0 0
    %2428 = vmatpush1.bf16.msra.mxu0 0
    %2429 = vmatprep.subr.bf16.mxu0 0
    %2430 = vmatpush1.bf16.msra.mxu0 0
    %2431 = vmatprep.mubr.bf16.mxu0 0
    %2432 = vmatmul.mubr.bf16.gmra.mrb[0].mxu0 %v2394
    %v2433 = vpop.f32.mrb[0].mxu0
    %v2434 = vadd.f32 0.0, %v2433
    %v2435 = vpop.f32.mrb[0].mxu0
    %v2436 = vpop.f32.mrb[0].mxu0
    %v2437 = vpop.f32.mrb[0].mxu0
    %2438 = vdwg.mxu0
    %v2440 = vsel %vm1693, %v1882, 0
    %v2443 = vsel %vm1889, %v952, 0
    %2445 = vmatprep.subr.bf16.mxu0 0
    %2446 = vmatpush1.bf16.msra.mxu0 %v2443
    %2447 = vmatprep.subr.bf16.mxu0 0
    %2448 = vmatpush1.bf16.msra.mxu0 0
    %2449 = vmatprep.subr.bf16.mxu0 0
    %2450 = vmatpush1.bf16.msra.mxu0 0
    %2451 = vmatprep.subr.bf16.mxu0 0
    %2452 = vmatpush1.bf16.msra.mxu0 0
    %2453 = vmatprep.subr.bf16.mxu0 0
    %2454 = vmatpush1.bf16.msra.mxu0 0
    %2455 = vmatprep.subr.bf16.mxu0 0
    %2456 = vmatpush1.bf16.msra.mxu0 0
    %2457 = vmatprep.subr.bf16.mxu0 0
    %2458 = vmatpush1.bf16.msra.mxu0 0
    %2459 = vmatprep.subr.bf16.mxu0 0
    %2460 = vmatpush1.bf16.msra.mxu0 0
    %2461 = vmatprep.subr.bf16.mxu0 0
    %2462 = vmatpush1.bf16.msra.mxu0 0
    %2463 = vmatprep.subr.bf16.mxu0 0
    %2464 = vmatpush1.bf16.msra.mxu0 0
    %2465 = vmatprep.subr.bf16.mxu0 0
    %2466 = vmatpush1.bf16.msra.mxu0 0
    %2467 = vmatprep.subr.bf16.mxu0 0
    %2468 = vmatpush1.bf16.msra.mxu0 0
    %2469 = vmatprep.subr.bf16.mxu0 0
    %2470 = vmatpush1.bf16.msra.mxu0 0
    %2471 = vmatprep.subr.bf16.mxu0 0
    %2472 = vmatpush1.bf16.msra.mxu0 0
    %2473 = vmatprep.subr.bf16.mxu0 0
    %2474 = vmatpush1.bf16.msra.mxu0 0
    %2475 = vmatprep.subr.bf16.mxu0 0
    %2476 = vmatpush1.bf16.msra.mxu0 0
    %2477 = vmatprep.mubr.bf16.mxu0 0
    %2478 = vmatmul.mubr.bf16.gmra.mrb[0].mxu0 %v2440
    %v2479 = vpop.f32.mrb[0].mxu0
    %v2480 = vadd.f32 0.0, %v2479
    %v2481 = vpop.f32.mrb[0].mxu0
    %v2482 = vpop.f32.mrb[0].mxu0
    %v2483 = vpop.f32.mrb[0].mxu0
    %2484 = vdwg.mxu0
    %v2486 = vsel %vm1693, %v1883, 0
    %v2489 = vsel %vm1889, %v953, 0
    %2491 = vmatprep.subr.bf16.mxu0 0
    %2492 = vmatpush1.bf16.msra.mxu0 %v2489
    %2493 = vmatprep.subr.bf16.mxu0 0
    %2494 = vmatpush1.bf16.msra.mxu0 0
    %2495 = vmatprep.subr.bf16.mxu0 0
    %2496 = vmatpush1.bf16.msra.mxu0 0
    %2497 = vmatprep.subr.bf16.mxu0 0
    %2498 = vmatpush1.bf16.msra.mxu0 0
    %2499 = vmatprep.subr.bf16.mxu0 0
    %2500 = vmatpush1.bf16.msra.mxu0 0
    %2501 = vmatprep.subr.bf16.mxu0 0
    %2502 = vmatpush1.bf16.msra.mxu0 0
    %2503 = vmatprep.subr.bf16.mxu0 0
    %2504 = vmatpush1.bf16.msra.mxu0 0
    %2505 = vmatprep.subr.bf16.mxu0 0
    %2506 = vmatpush1.bf16.msra.mxu0 0
    %2507 = vmatprep.subr.bf16.mxu0 0
    %2508 = vmatpush1.bf16.msra.mxu0 0
    %2509 = vmatprep.subr.bf16.mxu0 0
    %2510 = vmatpush1.bf16.msra.mxu0 0
    %2511 = vmatprep.subr.bf16.mxu0 0
    %2512 = vmatpush1.bf16.msra.mxu0 0
    %2513 = vmatprep.subr.bf16.mxu0 0
    %2514 = vmatpush1.bf16.msra.mxu0 0
    %2515 = vmatprep.subr.bf16.mxu0 0
    %2516 = vmatpush1.bf16.msra.mxu0 0
    %2517 = vmatprep.subr.bf16.mxu0 0
    %2518 = vmatpush1.bf16.msra.mxu0 0
    %2519 = vmatprep.subr.bf16.mxu0 0
    %2520 = vmatpush1.bf16.msra.mxu0 0
    %2521 = vmatprep.subr.bf16.mxu0 0
    %2522 = vmatpush1.bf16.msra.mxu0 0
    %2523 = vmatprep.mubr.bf16.mxu0 0
    %2524 = vmatmul.mubr.bf16.gmra.mrb[0].mxu0 %v2486
    %v2525 = vpop.f32.mrb[0].mxu0
    %v2526 = vadd.f32 0.0, %v2525
    %v2527 = vpop.f32.mrb[0].mxu0
    %v2528 = vpop.f32.mrb[0].mxu0
    %v2529 = vpop.f32.mrb[0].mxu0
    %2530 = vdwg.mxu0
    %v2532 = vsel %vm1693, %v1884, 0
    %v2535 = vsel %vm1889, %v954, 0
    %2537 = vmatprep.subr.bf16.mxu0 0
    %2538 = vmatpush1.bf16.msra.mxu0 %v2535
    %2539 = vmatprep.subr.bf16.mxu0 0
    %2540 = vmatpush1.bf16.msra.mxu0 0
    %2541 = vmatprep.subr.bf16.mxu0 0
    %2542 = vmatpush1.bf16.msra.mxu0 0
    %2543 = vmatprep.subr.bf16.mxu0 0
    %2544 = vmatpush1.bf16.msra.mxu0 0
    %2545 = vmatprep.subr.bf16.mxu0 0
    %2546 = vmatpush1.bf16.msra.mxu0 0
    %2547 = vmatprep.subr.bf16.mxu0 0
    %2548 = vmatpush1.bf16.msra.mxu0 0
    %2549 = vmatprep.subr.bf16.mxu0 0
    %2550 = vmatpush1.bf16.msra.mxu0 0
    %2551 = vmatprep.subr.bf16.mxu0 0
    %2552 = vmatpush1.bf16.msra.mxu0 0
    %2553 = vmatprep.subr.bf16.mxu0 0
    %2554 = vmatpush1.bf16.msra.mxu0 0
    %2555 = vmatprep.subr.bf16.mxu0 0
    %2556 = vmatpush1.bf16.msra.mxu0 0
    %2557 = vmatprep.subr.bf16.mxu0 0
    %2558 = vmatpush1.bf16.msra.mxu0 0
    %2559 = vmatprep.subr.bf16.mxu0 0
    %2560 = vmatpush1.bf16.msra.mxu0 0
    %2561 = vmatprep.subr.bf16.mxu0 0
    %2562 = vmatpush1.bf16.msra.mxu0 0
    %2563 = vmatprep.subr.bf16.mxu0 0
    %2564 = vmatpush1.bf16.msra.mxu0 0
    %2565 = vmatprep.subr.bf16.mxu0 0
    %2566 = vmatpush1.bf16.msra.mxu0 0
    %2567 = vmatprep.subr.bf16.mxu0 0
    %2568 = vmatpush1.bf16.msra.mxu0 0
    %2569 = vmatprep.mubr.bf16.mxu0 0
    %2570 = vmatmul.mubr.bf16.gmra.mrb[0].mxu0 %v2532
    %v2571 = vpop.f32.mrb[0].mxu0
    %v2572 = vadd.f32 0.0, %v2571
    %v2573 = vpop.f32.mrb[0].mxu0
    %v2574 = vpop.f32.mrb[0].mxu0
    %v2575 = vpop.f32.mrb[0].mxu0
    %2576 = vdwg.mxu0
    %v2578 = vsel %vm1693, %v1885, 0
    %v2581 = vsel %vm1889, %v955, 0
    %2583 = vmatprep.subr.bf16.mxu0 0
    %2584 = vmatpush1.bf16.msra.mxu0 %v2581
    %2585 = vmatprep.subr.bf16.mxu0 0
    %2586 = vmatpush1.bf16.msra.mxu0 0
    %2587 = vmatprep.subr.bf16.mxu0 0
    %2588 = vmatpush1.bf16.msra.mxu0 0
    %2589 = vmatprep.subr.bf16.mxu0 0
    %2590 = vmatpush1.bf16.msra.mxu0 0
    %2591 = vmatprep.subr.bf16.mxu0 0
    %2592 = vmatpush1.bf16.msra.mxu0 0
    %2593 = vmatprep.subr.bf16.mxu0 0
    %2594 = vmatpush1.bf16.msra.mxu0 0
    %2595 = vmatprep.subr.bf16.mxu0 0
    %2596 = vmatpush1.bf16.msra.mxu0 0
    %2597 = vmatprep.subr.bf16.mxu0 0
    %2598 = vmatpush1.bf16.msra.mxu0 0
    %2599 = vmatprep.subr.bf16.mxu0 0
    %2600 = vmatpush1.bf16.msra.mxu0 0
    %2601 = vmatprep.subr.bf16.mxu0 0
    %2602 = vmatpush1.bf16.msra.mxu0 0
    %2603 = vmatprep.subr.bf16.mxu0 0
    %2604 = vmatpush1.bf16.msra.mxu0 0
    %2605 = vmatprep.subr.bf16.mxu0 0
    %2606 = vmatpush1.bf16.msra.mxu0 0
    %2607 = vmatprep.subr.bf16.mxu0 0
    %2608 = vmatpush1.bf16.msra.mxu0 0
    %2609 = vmatprep.subr.bf16.mxu0 0
    %2610 = vmatpush1.bf16.msra.mxu0 0
    %2611 = vmatprep.subr.bf16.mxu0 0
    %2612 = vmatpush1.bf16.msra.mxu0 0
    %2613 = vmatprep.subr.bf16.mxu0 0
    %2614 = vmatpush1.bf16.msra.mxu0 0
    %2615 = vmatprep.mubr.bf16.mxu0 0
    %2616 = vmatmul.mubr.bf16.gmra.mrb[0].mxu0 %v2578
    %v2617 = vpop.f32.mrb[0].mxu0
    %v2618 = vadd.f32 0.0, %v2617
    %v2619 = vpop.f32.mrb[0].mxu0
    %v2620 = vpop.f32.mrb[0].mxu0
    %v2621 = vpop.f32.mrb[0].mxu0
    %2622 = vdwg.mxu0
    %v2623 = vpack.c.bf16 %v1974, %v1928
    %v2624 = vpack.c.bf16 %v2066, %v2020
    %v2625 = vpack.c.bf16 %v2158, %v2112
    %v2626 = vpack.c.bf16 %v2250, %v2204
    %v2627 = vpack.c.bf16 %v2342, %v2296
    %v2628 = vpack.c.bf16 %v2434, %v2388
    %v2629 = vpack.c.bf16 %v2526, %v2480
    %v2630 = vpack.c.bf16 %v2618, %v2572
    %v2631 = vld [vmem:[%s2] sm:$0xf]
    %v2632 = vld [vmem:[%s2 + $0x4] sm:$0xf]
    %v2633 = vld [vmem:[%s2 + $0x8] sm:$0xf]
    %v2634 = vld [vmem:[%s2 + $0xc] sm:$0xf]
    %v2635 = vld [vmem:[%s2 + $0x10] sm:$0xf]
    %v2636 = vld [vmem:[%s2 + $0x14] sm:$0xf]
    %v2637 = vld [vmem:[%s2 + $0x18] sm:$0xf]
    %v2638 = vld [vmem:[%s2 + $0x1c] sm:$0xf]
    %v2641 = vunpack.c.l.b16 %v2631
    %v2642 = vunpack.c.l.b16 %v2632
    %v2643 = vpack.c.b16 %v2642, %v2641
    %v2646 = vsel %vm956, %v2623, 0
    %v2649 = vsel %vm956, %v2624, 0
    %2651 = vmatprep.subr.bf16.mxu0 0
    %2652 = vmatpush1.bf16.msra.mxu0 %v2643
    %2653 = vmatprep.subr.bf16.mxu0 0
    %2654 = vmatpush1.bf16.msra.mxu0 0
    %2655 = vmatprep.subr.bf16.mxu0 0
    %2656 = vmatpush1.bf16.msra.mxu0 0
    %2657 = vmatprep.subr.bf16.mxu0 0
    %2658 = vmatpush1.bf16.msra.mxu0 0
    %2659 = vmatprep.subr.bf16.mxu0 0
    %2660 = vmatpush1.bf16.msra.mxu0 0
    %2661 = vmatprep.subr.bf16.mxu0 0
    %2662 = vmatpush1.bf16.msra.mxu0 0
    %2663 = vmatprep.subr.bf16.mxu0 0
    %2664 = vmatpush1.bf16.msra.mxu0 0
    %2665 = vmatprep.subr.bf16.mxu0 0
    %2666 = vmatpush1.bf16.msra.mxu0 0
    %2667 = vmatprep.subr.bf16.mxu0 0
    %2668 = vmatpush1.bf16.msra.mxu0 0
    %2669 = vmatprep.subr.bf16.mxu0 0
    %2670 = vmatpush1.bf16.msra.mxu0 0
    %2671 = vmatprep.subr.bf16.mxu0 0
    %2672 = vmatpush1.bf16.msra.mxu0 0
    %2673 = vmatprep.subr.bf16.mxu0 0
    %2674 = vmatpush1.bf16.msra.mxu0 0
    %2675 = vmatprep.subr.bf16.mxu0 0
    %2676 = vmatpush1.bf16.msra.mxu0 0
    %2677 = vmatprep.subr.bf16.mxu0 0
    %2678 = vmatpush1.bf16.msra.mxu0 0
    %2679 = vmatprep.subr.bf16.mxu0 0
    %2680 = vmatpush1.bf16.msra.mxu0 0
    %2681 = vmatprep.subr.bf16.mxu0 0
    %2682 = vmatpush1.bf16.msra.mxu0 0
    %2683 = vmatprep.mubr.bf16.mxu0 0
    %2684 = vmatmul.mubr.bf16.gmra.mrb[0].mxu0 %v2646
    %v2685 = vpop.f32.mrb[0].mxu0
    %v2686 = vadd.f32 0.0, %v2685
    %v2687 = vpop.f32.mrb[0].mxu0
    %v2688 = vpop.f32.mrb[0].mxu0
    %v2689 = vadd.f32 0.0, %v2688
    %v2690 = vpop.f32.mrb[0].mxu0
    %2691 = vmatprep.mubr.bf16.mxu0 0
    %2692 = vmatmul.mubr.bf16.gmra.mrb[0].mxu0 %v2649
    %v2693 = vpop.f32.mrb[0].mxu0
    %v2694 = vadd.f32 0.0, %v2693
    %v2695 = vpop.f32.mrb[0].mxu0
    %v2696 = vpop.f32.mrb[0].mxu0
    %v2697 = vadd.f32 0.0, %v2696
    %v2698 = vpop.f32.mrb[0].mxu0
    %2699 = vdwg.mxu0
    %v2702 = vunpack.c.l.b16 %v2633
    %v2703 = vunpack.c.l.b16 %v2634
    %v2704 = vpack.c.b16 %v2703, %v2702
    %v2707 = vsel %vm956, %v2625, 0
    %v2710 = vsel %vm956, %v2626, 0
    %2712 = vmatprep.subr.bf16.mxu0 0
    %2713 = vmatpush1.bf16.msra.mxu0 %v2704
    %2714 = vmatprep.subr.bf16.mxu0 0
    %2715 = vmatpush1.bf16.msra.mxu0 0
    %2716 = vmatprep.subr.bf16.mxu0 0
    %2717 = vmatpush1.bf16.msra.mxu0 0
    %2718 = vmatprep.subr.bf16.mxu0 0
    %2719 = vmatpush1.bf16.msra.mxu0 0
    %2720 = vmatprep.subr.bf16.mxu0 0
    %2721 = vmatpush1.bf16.msra.mxu0 0
    %2722 = vmatprep.subr.bf16.mxu0 0
    %2723 = vmatpush1.bf16.msra.mxu0 0
    %2724 = vmatprep.subr.bf16.mxu0 0
    %2725 = vmatpush1.bf16.msra.mxu0 0
    %2726 = vmatprep.subr.bf16.mxu0 0
    %2727 = vmatpush1.bf16.msra.mxu0 0
    %2728 = vmatprep.subr.bf16.mxu0 0
    %2729 = vmatpush1.bf16.msra.mxu0 0
    %2730 = vmatprep.subr.bf16.mxu0 0
    %2731 = vmatpush1.bf16.msra.mxu0 0
    %2732 = vmatprep.subr.bf16.mxu0 0
    %2733 = vmatpush1.bf16.msra.mxu0 0
    %2734 = vmatprep.subr.bf16.mxu0 0
    %2735 = vmatpush1.bf16.msra.mxu0 0
    %2736 = vmatprep.subr.bf16.mxu0 0
    %2737 = vmatpush1.bf16.msra.mxu0 0
    %2738 = vmatprep.subr.bf16.mxu0 0
    %2739 = vmatpush1.bf16.msra.mxu0 0
    %2740 = vmatprep.subr.bf16.mxu0 0
    %2741 = vmatpush1.bf16.msra.mxu0 0
    %2742 = vmatprep.subr.bf16.mxu0 0
    %2743 = vmatpush1.bf16.msra.mxu0 0
    %2744 = vmatprep.mubr.bf16.mxu0 0
    %2745 = vmatmul.mubr.bf16.gmra.mrb[0].mxu0 %v2707
    %v2746 = vpop.f32.mrb[0].mxu0
    %v2747 = vadd.f32 0.0, %v2746
    %v2748 = vpop.f32.mrb[0].mxu0
    %v2749 = vpop.f32.mrb[0].mxu0
    %v2750 = vadd.f32 0.0, %v2749
    %v2751 = vpop.f32.mrb[0].mxu0
    %2752 = vmatprep.mubr.bf16.mxu0 0
    %2753 = vmatmul.mubr.bf16.gmra.mrb[0].mxu0 %v2710
    %v2754 = vpop.f32.mrb[0].mxu0
    %v2755 = vadd.f32 0.0, %v2754
    %v2756 = vpop.f32.mrb[0].mxu0
    %v2757 = vpop.f32.mrb[0].mxu0
    %v2758 = vadd.f32 0.0, %v2757
    %v2759 = vpop.f32.mrb[0].mxu0
    %2760 = vdwg.mxu0
    %v2763 = vunpack.c.l.b16 %v2635
    %v2764 = vunpack.c.l.b16 %v2636
    %v2765 = vpack.c.b16 %v2764, %v2763
    %v2768 = vsel %vm956, %v2627, 0
    %v2771 = vsel %vm956, %v2628, 0
    %2773 = vmatprep.subr.bf16.mxu0 0
    %2774 = vmatpush1.bf16.msra.mxu0 %v2765
    %2775 = vmatprep.subr.bf16.mxu0 0
    %2776 = vmatpush1.bf16.msra.mxu0 0
    %2777 = vmatprep.subr.bf16.mxu0 0
    %2778 = vmatpush1.bf16.msra.mxu0 0
    %2779 = vmatprep.subr.bf16.mxu0 0
    %2780 = vmatpush1.bf16.msra.mxu0 0
    %2781 = vmatprep.subr.bf16.mxu0 0
    %2782 = vmatpush1.bf16.msra.mxu0 0
    %2783 = vmatprep.subr.bf16.mxu0 0
    %2784 = vmatpush1.bf16.msra.mxu0 0
    %2785 = vmatprep.subr.bf16.mxu0 0
    %2786 = vmatpush1.bf16.msra.mxu0 0
    %2787 = vmatprep.subr.bf16.mxu0 0
    %2788 = vmatpush1.bf16.msra.mxu0 0
    %2789 = vmatprep.subr.bf16.mxu0 0
    %2790 = vmatpush1.bf16.msra.mxu0 0
    %2791 = vmatprep.subr.bf16.mxu0 0
    %2792 = vmatpush1.bf16.msra.mxu0 0
    %2793 = vmatprep.subr.bf16.mxu0 0
    %2794 = vmatpush1.bf16.msra.mxu0 0
    %2795 = vmatprep.subr.bf16.mxu0 0
    %2796 = vmatpush1.bf16.msra.mxu0 0
    %2797 = vmatprep.subr.bf16.mxu0 0
    %2798 = vmatpush1.bf16.msra.mxu0 0
    %2799 = vmatprep.subr.bf16.mxu0 0
    %2800 = vmatpush1.bf16.msra.mxu0 0
    %2801 = vmatprep.subr.bf16.mxu0 0
    %2802 = vmatpush1.bf16.msra.mxu0 0
    %2803 = vmatprep.subr.bf16.mxu0 0
    %2804 = vmatpush1.bf16.msra.mxu0 0
    %2805 = vmatprep.mubr.bf16.mxu0 0
    %2806 = vmatmul.mubr.bf16.gmra.mrb[0].mxu0 %v2768
    %v2807 = vpop.f32.mrb[0].mxu0
    %v2808 = vadd.f32 0.0, %v2807
    %v2809 = vpop.f32.mrb[0].mxu0
    %v2810 = vpop.f32.mrb[0].mxu0
    %v2811 = vadd.f32 0.0, %v2810
    %v2812 = vpop.f32.mrb[0].mxu0
    %2813 = vmatprep.mubr.bf16.mxu0 0
    %2814 = vmatmul.mubr.bf16.gmra.mrb[0].mxu0 %v2771
    %v2815 = vpop.f32.mrb[0].mxu0
    %v2816 = vadd.f32 0.0, %v2815
    %v2817 = vpop.f32.mrb[0].mxu0
    %v2818 = vpop.f32.mrb[0].mxu0
    %v2819 = vadd.f32 0.0, %v2818
    %v2820 = vpop.f32.mrb[0].mxu0
    %2821 = vdwg.mxu0
    %v2824 = vunpack.c.l.b16 %v2637
    %v2825 = vunpack.c.l.b16 %v2638
    %v2826 = vpack.c.b16 %v2825, %v2824
    %v2829 = vsel %vm956, %v2629, 0
    %v2832 = vsel %vm956, %v2630, 0
    %2834 = vmatprep.subr.bf16.mxu0 0
    %2835 = vmatpush1.bf16.msra.mxu0 %v2826
    %2836 = vmatprep.subr.bf16.mxu0 0
    %2837 = vmatpush1.bf16.msra.mxu0 0
    %2838 = vmatprep.subr.bf16.mxu0 0
    %2839 = vmatpush1.bf16.msra.mxu0 0
    %2840 = vmatprep.subr.bf16.mxu0 0
    %2841 = vmatpush1.bf16.msra.mxu0 0
    %2842 = vmatprep.subr.bf16.mxu0 0
    %2843 = vmatpush1.bf16.msra.mxu0 0
    %2844 = vmatprep.subr.bf16.mxu0 0
    %2845 = vmatpush1.bf16.msra.mxu0 0
    %2846 = vmatprep.subr.bf16.mxu0 0
    %2847 = vmatpush1.bf16.msra.mxu0 0
    %2848 = vmatprep.subr.bf16.mxu0 0
    %2849 = vmatpush1.bf16.msra.mxu0 0
    %2850 = vmatprep.subr.bf16.mxu0 0
    %2851 = vmatpush1.bf16.msra.mxu0 0
    %2852 = vmatprep.subr.bf16.mxu0 0
    %2853 = vmatpush1.bf16.msra.mxu0 0
    %2854 = vmatprep.subr.bf16.mxu0 0
    %2855 = vmatpush1.bf16.msra.mxu0 0
    %2856 = vmatprep.subr.bf16.mxu0 0
    %2857 = vmatpush1.bf16.msra.mxu0 0
    %2858 = vmatprep.subr.bf16.mxu0 0
    %2859 = vmatpush1.bf16.msra.mxu0 0
    %2860 = vmatprep.subr.bf16.mxu0 0
    %2861 = vmatpush1.bf16.msra.mxu0 0
    %2862 = vmatprep.subr.bf16.mxu0 0
    %2863 = vmatpush1.bf16.msra.mxu0 0
    %2864 = vmatprep.subr.bf16.mxu0 0
    %2865 = vmatpush1.bf16.msra.mxu0 0
    %2866 = vmatprep.mubr.bf16.mxu0 0
    %2867 = vmatmul.mubr.bf16.gmra.mrb[0].mxu0 %v2829
    %v2868 = vpop.f32.mrb[0].mxu0
    %v2869 = vadd.f32 0.0, %v2868
    %v2870 = vpop.f32.mrb[0].mxu0
    %v2871 = vpop.f32.mrb[0].mxu0
    %v2872 = vadd.f32 0.0, %v2871
    %v2873 = vpop.f32.mrb[0].mxu0
    %2874 = vmatprep.mubr.bf16.mxu0 0
    %2875 = vmatmul.mubr.bf16.gmra.mrb[0].mxu0 %v2832
    %v2876 = vpop.f32.mrb[0].mxu0
    %v2877 = vadd.f32 0.0, %v2876
    %v2878 = vpop.f32.mrb[0].mxu0
    %v2879 = vpop.f32.mrb[0].mxu0
    %v2880 = vadd.f32 0.0, %v2879
    %v2881 = vpop.f32.mrb[0].mxu0
    %2882 = vdwg.mxu0
    %v2883 = vsel %vm85, %v2686, 0.0
    %v2884 = vsel %vm85, %v2747, 0.0
    %v2885 = vadd.f32 %v2883, %v2884
    %v2886 = vsel %vm85, %v2808, 0.0
    %v2887 = vadd.f32 %v2885, %v2886
    %v2888 = vsel %vm85, %v2869, 0.0
    %v2889 = vadd.f32 %v2887, %v2888
    %v2890 = vsel %vm85, %v2689, 0.0
    %v2891 = vsel %vm85, %v2750, 0.0
    %v2892 = vadd.f32 %v2890, %v2891
    %v2893 = vsel %vm85, %v2811, 0.0
    %v2894 = vadd.f32 %v2892, %v2893
    %v2895 = vsel %vm85, %v2872, 0.0
    %v2896 = vadd.f32 %v2894, %v2895
    %v2897 = vsel %vm85, %v2694, 0.0
    %v2898 = vsel %vm85, %v2755, 0.0
    %v2899 = vadd.f32 %v2897, %v2898
    %v2900 = vsel %vm85, %v2816, 0.0
    %v2901 = vadd.f32 %v2899, %v2900
    %v2902 = vsel %vm85, %v2877, 0.0
    %v2903 = vadd.f32 %v2901, %v2902
    %v2904 = vsel %vm85, %v2697, 0.0
    %v2905 = vsel %vm85, %v2758, 0.0
    %v2906 = vadd.f32 %v2904, %v2905
    %v2907 = vsel %vm85, %v2819, 0.0
    %v2908 = vadd.f32 %v2906, %v2907
    %v2909 = vsel %vm85, %v2880, 0.0
    %v2910 = vadd.f32 %v2908, %v2909
    %v2911 = vld [vmem:[%s3] sm:$0x1]
    %v2913 = vlaneseq
    %v2914 = vshrl.u32 %v2913, 7
    %v2915 = vsub.s32 0, %v2914
    %v2916 = vrot.slane %v2911, %v2915
    %v2918 = vadd.f32 %v2889, %v2916
    %v2919 = vadd.f32 %v2896, %v2916
    %v2920 = vadd.f32 %v2903, %v2916
    %v2921 = vadd.f32 %v2910, %v2916
    %2922 = vst.msk [vmem:[#allocation2] sm:$0xff] %vm85, %v2918
    %2923 = vst.msk [vmem:[#allocation2 + $0x8] sm:$0xff] %vm85, %v2919
    %2924 = vst.msk [vmem:[#allocation2 + $0x10] sm:$0xff] %vm85, %v2920
    %2925 = vst.msk [vmem:[#allocation2 + $0x18] sm:$0xff] %vm85, %v2921
    // Predicated region
    $region18: #{tpu_custom_call.1} parent=1 // pred_check
      _
    $region19: #{tpu_custom_call.1} parent=1 // pred_check_branch
      %2927 = sbr.rel (0) target = $region21
    $region20: #{tpu_custom_call.1} parent=1 // pred_region
      %s2929 = ssub.s32 512, 512
      %2930 = vsyncadd [#allocation3], %s2929
      %s2931 = sshll.u32 [#allocation2], 4
      %s2932 = int_to_ptr.vmem [resolvable:$true] %s2931
      %2937 = dma.vmem_to_hbm [thread:$0]  %s2932, 512, %s4, [#allocation3], 128, 128, 8
    $region21: #{tpu_custom_call.1} parent=1 // pred_fallthru
      _
    // Predicated region
    $region22: #{tpu_custom_call.1} parent=1 // pred_check
      _
    $region23: #{tpu_custom_call.1} parent=1 // pred_check_branch
      %2939 = sbr.rel (0) target = $region25
    $region24: #{tpu_custom_call.1} parent=1 // pred_region
      %2940 = dma.done [#allocation3], 512
    $region25: #{tpu_custom_call.1} parent=1 // pred_fallthru
      _
    %2941 = vsyncpa [#allocation3], 1

</llo_original>
